<compile_context>
chip_gen: v7x
topology: tpu7x:2x2x1
jax: 0.10.0
libtpu: 0.0.40
codegen_flags: <defaults>
</compile_context>

<pallas_src>
import jax
import jax.numpy as jnp
from jax.experimental import pallas as pl
from jax.experimental.pallas import tpu as pltpu

EPS = 1e-5          # nn.BatchNorm2d default eps
NEG_SLOPE = 0.1     # nn.LeakyReLU(0.1)
CPAD = 16           # channel padding = bf16 sublane packing -> tile-aligned staging
_TAPS = tuple((dy, dx) for dy in range(3) for dx in range(3))


def _make_kernel(count, Cout, Wp, LPAD, S_HALF):
    """count = N*H*W (real pixels per channel); S_HALF = per-parity slab width."""
    inv_cnt = 1.0 / float(count)

    def kernel(xe_ref, xo_ref, me_ref, mo_ref, w1_ref, b1_ref, w2_ref, b2_ref,
               out_ref, xe_buf, xo_buf, im1e, im1o, y1e_buf, y1o_buf, im2):
        # ---- BatchNorm2d (affine=False, biased batch stats) + LeakyReLU, f32 ----
        xe = xe_ref[...]                                   # (CPAD, LHALF) even flat positions
        xo = xo_ref[...]                                   # (CPAD, LHALF) odd  flat positions
        s = (jnp.sum(xe, axis=1, keepdims=True) +
             jnp.sum(xo, axis=1, keepdims=True)) * inv_cnt           # mean   (zero pad is inert)
        sq = (jnp.sum(xe * xe, axis=1, keepdims=True) +
              jnp.sum(xo * xo, axis=1, keepdims=True)) * inv_cnt     # E[x^2]
        scale = jax.lax.rsqrt(sq - s * s + EPS)                      # EUP

        def bn_act(v, msk):
            v = (v - s) * scale
            v = jnp.where(v > 0, v, NEG_SLOPE * v)
            return (v * msk).astype(jnp.bfloat16)          # mask re-zeroes the conv halo

        xe_buf[...] = bn_act(xe, me_ref[...])
        xo_buf[...] = bn_act(xo, mo_ref[...])

        # ---- Conv1 (3x3, pad 1): fused im2col GEMM per output parity plane ----
        # slab column q (even: 2p / odd: 2p+1) needs flat input index q + st.
        for t, (dy, dx) in enumerate(_TAPS):
            st = dy * Wp + dx + (LPAD - Wp - 1)            # flat tap offset (>= 1)
            for parity, dst in ((0, im1e), (1, im1o)):
                tot = st + parity
                src = xe_buf if tot % 2 == 0 else xo_buf
                m0 = tot // 2
                dst[t * CPAD:(t + 1) * CPAD, :] = src[:, m0:m0 + S_HALF]

        w1 = w1_ref[...]                                   # (Cout, 9*CPAD) bf16
        b1 = b1_ref[...]                                   # (Cout, 1) f32
        mask_e = me_ref[:, LPAD // 2:LPAD // 2 + S_HALF]   # interior mask on the even slab
        mask_o = mo_ref[:, LPAD // 2:LPAD // 2 + S_HALF]
        y1e = (jnp.dot(w1, im1e[...], preferred_element_type=jnp.float32) + b1) * mask_e
        y1o = (jnp.dot(w1, im1o[...], preferred_element_type=jnp.float32) + b1) * mask_o

        # stage conv1 output (already parity-split == the stride-2 planes), bf16
        y1e_buf[...] = jnp.zeros_like(y1e_buf)             # rows >= Cout / tail lanes must be 0
        y1o_buf[...] = jnp.zeros_like(y1o_buf)
        y1e_buf[0:Cout, 0:S_HALF] = y1e.astype(jnp.bfloat16)
        y1o_buf[0:Cout, 0:S_HALF] = y1o.astype(jnp.bfloat16)

        # ---- Conv2 (3x3, pad 1, stride 2): each tap is a contiguous slice of a parity plane ----
        for t, (dy, dx) in enumerate(_TAPS):
            off = dy * Wp + dx                             # flat offset on the conv1 slab
            src = y1e_buf if off % 2 == 0 else y1o_buf
            m0 = off // 2
            im2[t * CPAD:(t + 1) * CPAD, :] = src[:, m0:m0 + S_HALF]

        y2 = jnp.dot(w2_ref[...], im2[...], preferred_element_type=jnp.float32)
        out_ref[...] = y2 + b2_ref[...]                    # (Cout, S_HALF) lane-dense

    return kernel


def bn_relu_conv_conv(x_nchw, w1, b1, w2, b2):
    """x_nchw: (N, Cin, H, W). Weights HWIO: w1 (3,3,Cin,Cout), w2 (3,3,Cout,Cout)."""
    x = x_nchw.astype(jnp.float32)
    N, Cin, H, W = x.shape
    Cout = w1.shape[-1]
    assert H % 2 == 0 and W % 2 == 0, "toy kernel assumes even spatial dims"
    Hp, Wp = H + 2, W + 2
    Ho, Wo = (H - 1) // 2 + 1, (W - 1) // 2 + 1
    LIMG = Hp * Wp                      # flattened padded image
    SLAB1 = N * LIMG                    # conv1 output slab (padded layout, both parities)
    S_HALF = SLAB1 // 2                 # per-parity slab width == conv2 output slab width
    LPAD = Wp + 2                       # even slack so parity is preserved
    LBUF = SLAB1 + 2 * LPAD
    LHALF = LBUF // 2

    # --- flattened, zero-padded input, channel-padded to CPAD, split by flat parity ---
    xp = jnp.pad(x, ((0, 0), (0, CPAD - Cin), (1, 1), (1, 1)))
    xflat = jnp.transpose(xp, (1, 0, 2, 3)).reshape(CPAD, SLAB1)
    xflat = jnp.pad(xflat, ((0, 0), (LPAD, LPAD)))                    # (CPAD, LBUF)
    x_e, x_o = xflat[:, 0::2], xflat[:, 1::2]                         # (CPAD, LHALF) each

    # interior mask (1 where a real pixel lives in the flattened padded layout)
    m2d = jnp.zeros((Hp, Wp), jnp.float32).at[1:H + 1, 1:W + 1].set(1.0)
    mflat = jnp.pad(jnp.tile(m2d.reshape(-1), N), (LPAD, LPAD))       # (LBUF,)
    m_e = mflat[0::2].reshape(1, LHALF)
    m_o = mflat[1::2].reshape(1, LHALF)

    # im2col weights: channel-pad to CPAD (zero rows), transpose to (Cout, 9*CPAD), bf16
    w1p = jnp.pad(w1.astype(jnp.float32), ((0, 0), (0, 0), (0, CPAD - Cin), (0, 0)))
    w2p = jnp.pad(w2.astype(jnp.float32), ((0, 0), (0, 0), (0, CPAD - Cout), (0, 0)))
    w1t = w1p.reshape(9 * CPAD, Cout).T.astype(jnp.bfloat16)
    w2t = w2p.reshape(9 * CPAD, Cout).T.astype(jnp.bfloat16)
    b1c = b1.astype(jnp.float32).reshape(Cout, 1)
    b2c = b2.astype(jnp.float32).reshape(Cout, 1)

    kernel = _make_kernel(N * H * W, Cout, Wp, LPAD, S_HALF)
    out = pl.pallas_call(
        kernel,
        out_shape=jax.ShapeDtypeStruct((Cout, S_HALF), jnp.float32),
        in_specs=[pl.BlockSpec(memory_space=pltpu.MemorySpace.VMEM)] * 8,
        out_specs=pl.BlockSpec(memory_space=pltpu.MemorySpace.VMEM),
        scratch_shapes=[
            pltpu.VMEM((CPAD, LHALF), jnp.bfloat16),        # xe_buf  (BN/ReLU out, even)
            pltpu.VMEM((CPAD, LHALF), jnp.bfloat16),        # xo_buf  (BN/ReLU out, odd)
            pltpu.VMEM((9 * CPAD, S_HALF), jnp.bfloat16),   # im1e    (conv1 im2col, even)
            pltpu.VMEM((9 * CPAD, S_HALF), jnp.bfloat16),   # im1o    (conv1 im2col, odd)
            pltpu.VMEM((CPAD, LHALF), jnp.bfloat16),        # y1e_buf (conv1 out, even plane)
            pltpu.VMEM((CPAD, LHALF), jnp.bfloat16),        # y1o_buf (conv1 out, odd plane)
            pltpu.VMEM((9 * CPAD, S_HALF), jnp.bfloat16),   # im2     (conv2 im2col)
        ],
        compiler_params=pltpu.CompilerParams(vmem_limit_bytes=8 * 1024 * 1024),
    )(x_e, x_o, m_e, m_o, w1t, b1c, w2t, b2c)

    # lane-dense (Cout, slab) -> NCHW: drop garbage columns, transpose in the wrapper (XLA)
    out = out.reshape(Cout, N, Hp // 2, Wp)[:, :, :Ho, :Wo]
    return jnp.transpose(out, (1, 0, 2, 3))


def _reference(x_nchw, w1, b1, w2, b2):
    """Pure-JAX reference matching the PyTorch forward."""
    x = x_nchw.astype(jnp.float32)
    mean = jnp.mean(x, axis=(0, 2, 3), keepdims=True)
    var = jnp.mean((x - mean) ** 2, axis=(0, 2, 3), keepdims=True)
    xn = (x - mean) / jnp.sqrt(var + EPS)
    xn = jnp.where(xn > 0, xn, NEG_SLOPE * xn)
    w1_oihw = jnp.transpose(w1, (3, 2, 0, 1))
    y = jax.lax.conv_general_dilated(
        xn, w1_oihw, window_strides=(1, 1), padding=((1, 1), (1, 1)),
        dimension_numbers=("NCHW", "OIHW", "NCHW")) + b1[None, :, None, None]
    w2_oihw = jnp.transpose(w2, (3, 2, 0, 1))
    y = jax.lax.conv_general_dilated(
        y, w2_oihw, window_strides=(2, 2), padding=((1, 1), (1, 1)),
        dimension_numbers=("NCHW", "OIHW", "NCHW")) + b2[None, :, None, None]
    return y


if __name__ == "__main__":
    N, Cin, Cout, H, W = 2, 4, 8, 16, 16

    key = jax.random.PRNGKey(0)
    kx, k1, k2, k3, k4 = jax.random.split(key, 5)
    x = jax.random.normal(kx, (N, Cin, H, W), dtype=jnp.float32)
    # deterministic synthetic parameters (HWIO layout for the kernel)
    w1 = jax.random.normal(k1, (3, 3, Cin, Cout), dtype=jnp.float32) * 0.1
    b1 = jax.random.normal(k2, (Cout,), dtype=jnp.float32) * 0.1
    w2 = jax.random.normal(k3, (3, 3, Cout, Cout), dtype=jnp.float32) * 0.1
    b2 = jax.random.normal(k4, (Cout,), dtype=jnp.float32) * 0.1

    out = bn_relu_conv_conv(x, w1, b1, w2, b2)
    out = jax.block_until_ready(out)

    ref = jax.block_until_ready(_reference(x, w1, b1, w2, b2))
    assert out.shape == ref.shape == (N, Cout, (H + 1) // 2, (W + 1) // 2), out.shape
    # GEMM operands are bf16 (f32 accumulation), so compare at 1e-2 tolerance.
    assert jnp.allclose(out, ref, rtol=1e-2, atol=1e-2), float(jnp.max(jnp.abs(out - ref)))

    print("KERNEL_OK")
</pallas_src>

<mosaic_0001>
module attributes {stable_mosaic.version = 11 : i64} {
  func.func @kernel(%arg0: memref<16x344xf32, #tpu.memory_space<vmem>>, %arg1: memref<16x344xf32, #tpu.memory_space<vmem>>, %arg2: memref<1x344xf32, #tpu.memory_space<vmem>>, %arg3: memref<1x344xf32, #tpu.memory_space<vmem>>, %arg4: memref<8x144xbf16, #tpu.memory_space<vmem>>, %arg5: memref<8x1xf32, #tpu.memory_space<vmem>>, %arg6: memref<8x144xbf16, #tpu.memory_space<vmem>>, %arg7: memref<8x1xf32, #tpu.memory_space<vmem>>, %arg8: memref<8x324xf32, #tpu.memory_space<vmem>>, %arg9: memref<16x344xbf16, #tpu.memory_space<vmem>>, %arg10: memref<16x344xbf16, #tpu.memory_space<vmem>>, %arg11: memref<144x324xbf16, #tpu.memory_space<vmem>>, %arg12: memref<144x324xbf16, #tpu.memory_space<vmem>>, %arg13: memref<16x344xbf16, #tpu.memory_space<vmem>>, %arg14: memref<16x344xbf16, #tpu.memory_space<vmem>>, %arg15: memref<144x324xbf16, #tpu.memory_space<vmem>>) attributes {dimension_semantics = [], scalar_prefetch = 0 : i64, scratch_operands = 7 : i64, tpu.core_type = #tpu.core_type<tc>} {
    %c0 = arith.constant 0 : index
    %c0_0 = arith.constant 0 : index
    %0 = vector.load %arg0[%c0, %c0_0] : memref<16x344xf32, #tpu.memory_space<vmem>>, vector<16x344xf32>
    %c0_1 = arith.constant 0 : index
    %c0_2 = arith.constant 0 : index
    %1 = vector.load %arg1[%c0_1, %c0_2] : memref<16x344xf32, #tpu.memory_space<vmem>>, vector<16x344xf32>
    %cst = arith.constant dense<0.000000e+00> : vector<16xf32>
    %2 = vector.multi_reduction <add>, %0, %cst [1] : vector<16x344xf32> to vector<16xf32>
    %3 = vector.shape_cast %2 : vector<16xf32> to vector<16x1xf32>
    %cst_3 = arith.constant dense<0.000000e+00> : vector<16xf32>
    %4 = vector.multi_reduction <add>, %1, %cst_3 [1] : vector<16x344xf32> to vector<16xf32>
    %5 = vector.shape_cast %4 : vector<16xf32> to vector<16x1xf32>
    %6 = arith.addf %3, %5 : vector<16x1xf32>
    %cst_4 = arith.constant 0.001953125 : f32
    %7 = vector.broadcast %cst_4 : f32 to vector<16x1xf32>
    %8 = arith.mulf %6, %7 : vector<16x1xf32>
    %9 = arith.mulf %0, %0 : vector<16x344xf32>
    %cst_5 = arith.constant dense<0.000000e+00> : vector<16xf32>
    %10 = vector.multi_reduction <add>, %9, %cst_5 [1] : vector<16x344xf32> to vector<16xf32>
    %11 = vector.shape_cast %10 : vector<16xf32> to vector<16x1xf32>
    %12 = arith.mulf %1, %1 : vector<16x344xf32>
    %cst_6 = arith.constant dense<0.000000e+00> : vector<16xf32>
    %13 = vector.multi_reduction <add>, %12, %cst_6 [1] : vector<16x344xf32> to vector<16xf32>
    %14 = vector.shape_cast %13 : vector<16xf32> to vector<16x1xf32>
    %15 = arith.addf %11, %14 : vector<16x1xf32>
    %cst_7 = arith.constant 0.001953125 : f32
    %16 = vector.broadcast %cst_7 : f32 to vector<16x1xf32>
    %17 = arith.mulf %15, %16 : vector<16x1xf32>
    %18 = arith.mulf %8, %8 : vector<16x1xf32>
    %19 = arith.subf %17, %18 : vector<16x1xf32>
    %cst_8 = arith.constant 9.99999974E-6 : f32
    %20 = vector.broadcast %cst_8 : f32 to vector<16x1xf32>
    %21 = arith.addf %19, %20 : vector<16x1xf32>
    %22 = math.rsqrt %21 : vector<16x1xf32>
    %c0_9 = arith.constant 0 : index
    %c0_10 = arith.constant 0 : index
    %23 = vector.load %arg2[%c0_9, %c0_10] : memref<1x344xf32, #tpu.memory_space<vmem>>, vector<1x344xf32>
    %24 = vector.broadcast %8 : vector<16x1xf32> to vector<16x344xf32>
    %25 = arith.subf %0, %24 : vector<16x344xf32>
    %26 = vector.broadcast %22 : vector<16x1xf32> to vector<16x344xf32>
    %27 = arith.mulf %25, %26 : vector<16x344xf32>
    %cst_11 = arith.constant 0.000000e+00 : f32
    %28 = vector.broadcast %cst_11 : f32 to vector<16x344xf32>
    %29 = arith.cmpf ogt, %27, %28 : vector<16x344xf32>
    %cst_12 = arith.constant 1.000000e-01 : f32
    %30 = vector.broadcast %cst_12 : f32 to vector<16x344xf32>
    %31 = arith.mulf %30, %27 : vector<16x344xf32>
    %32 = arith.select %29, %27, %31 : vector<16x344xi1>, vector<16x344xf32>
    %33 = vector.broadcast %23 : vector<1x344xf32> to vector<16x344xf32>
    %34 = arith.mulf %32, %33 : vector<16x344xf32>
    %35 = arith.truncf %34 : vector<16x344xf32> to vector<16x344xbf16>
    %c0_13 = arith.constant 0 : index
    %c0_14 = arith.constant 0 : index
    %36 = vector.load %arg9[%c0_13, %c0_14] : memref<16x344xbf16, #tpu.memory_space<vmem>>, vector<16x344xbf16>
    tpu.vector_store %arg9[%c0_13, %c0_14], %35 {strides = array<i32>} : memref<16x344xbf16, #tpu.memory_space<vmem>>, vector<16x344xbf16>,
    %c0_15 = arith.constant 0 : index
    %c0_16 = arith.constant 0 : index
    %37 = vector.load %arg3[%c0_15, %c0_16] : memref<1x344xf32, #tpu.memory_space<vmem>>, vector<1x344xf32>
    %38 = vector.broadcast %8 : vector<16x1xf32> to vector<16x344xf32>
    %39 = arith.subf %1, %38 : vector<16x344xf32>
    %40 = vector.broadcast %22 : vector<16x1xf32> to vector<16x344xf32>
    %41 = arith.mulf %39, %40 : vector<16x344xf32>
    %cst_17 = arith.constant 0.000000e+00 : f32
    %42 = vector.broadcast %cst_17 : f32 to vector<16x344xf32>
    %43 = arith.cmpf ogt, %41, %42 : vector<16x344xf32>
    %cst_18 = arith.constant 1.000000e-01 : f32
    %44 = vector.broadcast %cst_18 : f32 to vector<16x344xf32>
    %45 = arith.mulf %44, %41 : vector<16x344xf32>
    %46 = arith.select %43, %41, %45 : vector<16x344xi1>, vector<16x344xf32>
    %47 = vector.broadcast %37 : vector<1x344xf32> to vector<16x344xf32>
    %48 = arith.mulf %46, %47 : vector<16x344xf32>
    %49 = arith.truncf %48 : vector<16x344xf32> to vector<16x344xbf16>
    %c0_19 = arith.constant 0 : index
    %c0_20 = arith.constant 0 : index
    %50 = vector.load %arg10[%c0_19, %c0_20] : memref<16x344xbf16, #tpu.memory_space<vmem>>, vector<16x344xbf16>
    tpu.vector_store %arg10[%c0_19, %c0_20], %49 {strides = array<i32>} : memref<16x344xbf16, #tpu.memory_space<vmem>>, vector<16x344xbf16>,
    %c0_21 = arith.constant 0 : index
    %c0_22 = arith.constant 0 : index
    %51 = vector.load %arg10[%c0_21, %c0_22] : memref<16x344xbf16, #tpu.memory_space<vmem>>, vector<16x324xbf16>
    %c0_23 = arith.constant 0 : index
    %c0_24 = arith.constant 0 : index
    %52 = vector.load %arg11[%c0_23, %c0_24] : memref<144x324xbf16, #tpu.memory_space<vmem>>, vector<16x324xbf16>
    tpu.vector_store %arg11[%c0_23, %c0_24], %51 {strides = array<i32>} : memref<144x324xbf16, #tpu.memory_space<vmem>>, vector<16x324xbf16>,
    %c0_25 = arith.constant 0 : index
    %c1 = arith.constant 1 : index
    %53 = vector.load %arg9[%c0_25, %c1] : memref<16x344xbf16, #tpu.memory_space<vmem>>, vector<16x324xbf16>
    %c0_26 = arith.constant 0 : index
    %c0_27 = arith.constant 0 : index
    %54 = vector.load %arg12[%c0_26, %c0_27] : memref<144x324xbf16, #tpu.memory_space<vmem>>, vector<16x324xbf16>
    tpu.vector_store %arg12[%c0_26, %c0_27], %53 {strides = array<i32>} : memref<144x324xbf16, #tpu.memory_space<vmem>>, vector<16x324xbf16>,
    %c0_28 = arith.constant 0 : index
    %c1_29 = arith.constant 1 : index
    %55 = vector.load %arg9[%c0_28, %c1_29] : memref<16x344xbf16, #tpu.memory_space<vmem>>, vector<16x324xbf16>
    %c16 = arith.constant 16 : index
    %c0_30 = arith.constant 0 : index
    %56 = vector.load %arg11[%c16, %c0_30] : memref<144x324xbf16, #tpu.memory_space<vmem>>, vector<16x324xbf16>
    tpu.vector_store %arg11[%c16, %c0_30], %55 {strides = array<i32>} : memref<144x324xbf16, #tpu.memory_space<vmem>>, vector<16x324xbf16>,
    %c0_31 = arith.constant 0 : index
    %c1_32 = arith.constant 1 : index
    %57 = vector.load %arg10[%c0_31, %c1_32] : memref<16x344xbf16, #tpu.memory_space<vmem>>, vector<16x324xbf16>
    %c16_33 = arith.constant 16 : index
    %c0_34 = arith.constant 0 : index
    %58 = vector.load %arg12[%c16_33, %c0_34] : memref<144x324xbf16, #tpu.memory_space<vmem>>, vector<16x324xbf16>
    tpu.vector_store %arg12[%c16_33, %c0_34], %57 {strides = array<i32>} : memref<144x324xbf16, #tpu.memory_space<vmem>>, vector<16x324xbf16>,
    %c0_35 = arith.constant 0 : index
    %c1_36 = arith.constant 1 : index
    %59 = vector.load %arg10[%c0_35, %c1_36] : memref<16x344xbf16, #tpu.memory_space<vmem>>, vector<16x324xbf16>
    %c32 = arith.constant 32 : index
    %c0_37 = arith.constant 0 : index
    %60 = vector.load %arg11[%c32, %c0_37] : memref<144x324xbf16, #tpu.memory_space<vmem>>, vector<16x324xbf16>
    tpu.vector_store %arg11[%c32, %c0_37], %59 {strides = array<i32>} : memref<144x324xbf16, #tpu.memory_space<vmem>>, vector<16x324xbf16>,
    %c0_38 = arith.constant 0 : index
    %c2 = arith.constant 2 : index
    %61 = vector.load %arg9[%c0_38, %c2] : memref<16x344xbf16, #tpu.memory_space<vmem>>, vector<16x324xbf16>
    %c32_39 = arith.constant 32 : index
    %c0_40 = arith.constant 0 : index
    %62 = vector.load %arg12[%c32_39, %c0_40] : memref<144x324xbf16, #tpu.memory_space<vmem>>, vector<16x324xbf16>
    tpu.vector_store %arg12[%c32_39, %c0_40], %61 {strides = array<i32>} : memref<144x324xbf16, #tpu.memory_space<vmem>>, vector<16x324xbf16>,
    %c0_41 = arith.constant 0 : index
    %c9 = arith.constant 9 : index
    %63 = vector.load %arg10[%c0_41, %c9] : memref<16x344xbf16, #tpu.memory_space<vmem>>, vector<16x324xbf16>
    %c48 = arith.constant 48 : index
    %c0_42 = arith.constant 0 : index
    %64 = vector.load %arg11[%c48, %c0_42] : memref<144x324xbf16, #tpu.memory_space<vmem>>, vector<16x324xbf16>
    tpu.vector_store %arg11[%c48, %c0_42], %63 {strides = array<i32>} : memref<144x324xbf16, #tpu.memory_space<vmem>>, vector<16x324xbf16>,
    %c0_43 = arith.constant 0 : index
    %c10 = arith.constant 10 : index
    %65 = vector.load %arg9[%c0_43, %c10] : memref<16x344xbf16, #tpu.memory_space<vmem>>, vector<16x324xbf16>
    %c48_44 = arith.constant 48 : index
    %c0_45 = arith.constant 0 : index
    %66 = vector.load %arg12[%c48_44, %c0_45] : memref<144x324xbf16, #tpu.memory_space<vmem>>, vector<16x324xbf16>
    tpu.vector_store %arg12[%c48_44, %c0_45], %65 {strides = array<i32>} : memref<144x324xbf16, #tpu.memory_space<vmem>>, vector<16x324xbf16>,
    %c0_46 = arith.constant 0 : index
    %c10_47 = arith.constant 10 : index
    %67 = vector.load %arg9[%c0_46, %c10_47] : memref<16x344xbf16, #tpu.memory_space<vmem>>, vector<16x324xbf16>
    %c64 = arith.constant 64 : index
    %c0_48 = arith.constant 0 : index
    %68 = vector.load %arg11[%c64, %c0_48] : memref<144x324xbf16, #tpu.memory_space<vmem>>, vector<16x324xbf16>
    tpu.vector_store %arg11[%c64, %c0_48], %67 {strides = array<i32>} : memref<144x324xbf16, #tpu.memory_space<vmem>>, vector<16x324xbf16>,
    %c0_49 = arith.constant 0 : index
    %c10_50 = arith.constant 10 : index
    %69 = vector.load %arg10[%c0_49, %c10_50] : memref<16x344xbf16, #tpu.memory_space<vmem>>, vector<16x324xbf16>
    %c64_51 = arith.constant 64 : index
    %c0_52 = arith.constant 0 : index
    %70 = vector.load %arg12[%c64_51, %c0_52] : memref<144x324xbf16, #tpu.memory_space<vmem>>, vector<16x324xbf16>
    tpu.vector_store %arg12[%c64_51, %c0_52], %69 {strides = array<i32>} : memref<144x324xbf16, #tpu.memory_space<vmem>>, vector<16x324xbf16>,
    %c0_53 = arith.constant 0 : index
    %c10_54 = arith.constant 10 : index
    %71 = vector.load %arg10[%c0_53, %c10_54] : memref<16x344xbf16, #tpu.memory_space<vmem>>, vector<16x324xbf16>
    %c80 = arith.constant 80 : index
    %c0_55 = arith.constant 0 : index
    %72 = vector.load %arg11[%c80, %c0_55] : memref<144x324xbf16, #tpu.memory_space<vmem>>, vector<16x324xbf16>
    tpu.vector_store %arg11[%c80, %c0_55], %71 {strides = array<i32>} : memref<144x324xbf16, #tpu.memory_space<vmem>>, vector<16x324xbf16>,
    %c0_56 = arith.constant 0 : index
    %c11 = arith.constant 11 : index
    %73 = vector.load %arg9[%c0_56, %c11] : memref<16x344xbf16, #tpu.memory_space<vmem>>, vector<16x324xbf16>
    %c80_57 = arith.constant 80 : index
    %c0_58 = arith.constant 0 : index
    %74 = vector.load %arg12[%c80_57, %c0_58] : memref<144x324xbf16, #tpu.memory_space<vmem>>, vector<16x324xbf16>
    tpu.vector_store %arg12[%c80_57, %c0_58], %73 {strides = array<i32>} : memref<144x324xbf16, #tpu.memory_space<vmem>>, vector<16x324xbf16>,
    %c0_59 = arith.constant 0 : index
    %c18 = arith.constant 18 : index
    %75 = vector.load %arg10[%c0_59, %c18] : memref<16x344xbf16, #tpu.memory_space<vmem>>, vector<16x324xbf16>
    %c96 = arith.constant 96 : index
    %c0_60 = arith.constant 0 : index
    %76 = vector.load %arg11[%c96, %c0_60] : memref<144x324xbf16, #tpu.memory_space<vmem>>, vector<16x324xbf16>
    tpu.vector_store %arg11[%c96, %c0_60], %75 {strides = array<i32>} : memref<144x324xbf16, #tpu.memory_space<vmem>>, vector<16x324xbf16>,
    %c0_61 = arith.constant 0 : index
    %c19 = arith.constant 19 : index
    %77 = vector.load %arg9[%c0_61, %c19] : memref<16x344xbf16, #tpu.memory_space<vmem>>, vector<16x324xbf16>
    %c96_62 = arith.constant 96 : index
    %c0_63 = arith.constant 0 : index
    %78 = vector.load %arg12[%c96_62, %c0_63] : memref<144x324xbf16, #tpu.memory_space<vmem>>, vector<16x324xbf16>
    tpu.vector_store %arg12[%c96_62, %c0_63], %77 {strides = array<i32>} : memref<144x324xbf16, #tpu.memory_space<vmem>>, vector<16x324xbf16>,
    %c0_64 = arith.constant 0 : index
    %c19_65 = arith.constant 19 : index
    %79 = vector.load %arg9[%c0_64, %c19_65] : memref<16x344xbf16, #tpu.memory_space<vmem>>, vector<16x324xbf16>
    %c112 = arith.constant 112 : index
    %c0_66 = arith.constant 0 : index
    %80 = vector.load %arg11[%c112, %c0_66] : memref<144x324xbf16, #tpu.memory_space<vmem>>, vector<16x324xbf16>
    tpu.vector_store %arg11[%c112, %c0_66], %79 {strides = array<i32>} : memref<144x324xbf16, #tpu.memory_space<vmem>>, vector<16x324xbf16>,
    %c0_67 = arith.constant 0 : index
    %c19_68 = arith.constant 19 : index
    %81 = vector.load %arg10[%c0_67, %c19_68] : memref<16x344xbf16, #tpu.memory_space<vmem>>, vector<16x324xbf16>
    %c112_69 = arith.constant 112 : index
    %c0_70 = arith.constant 0 : index
    %82 = vector.load %arg12[%c112_69, %c0_70] : memref<144x324xbf16, #tpu.memory_space<vmem>>, vector<16x324xbf16>
    tpu.vector_store %arg12[%c112_69, %c0_70], %81 {strides = array<i32>} : memref<144x324xbf16, #tpu.memory_space<vmem>>, vector<16x324xbf16>,
    %c0_71 = arith.constant 0 : index
    %c19_72 = arith.constant 19 : index
    %83 = vector.load %arg10[%c0_71, %c19_72] : memref<16x344xbf16, #tpu.memory_space<vmem>>, vector<16x324xbf16>
    %c128 = arith.constant 128 : index
    %c0_73 = arith.constant 0 : index
    %84 = vector.load %arg11[%c128, %c0_73] : memref<144x324xbf16, #tpu.memory_space<vmem>>, vector<16x324xbf16>
    tpu.vector_store %arg11[%c128, %c0_73], %83 {strides = array<i32>} : memref<144x324xbf16, #tpu.memory_space<vmem>>, vector<16x324xbf16>,
    %c0_74 = arith.constant 0 : index
    %c20 = arith.constant 20 : index
    %85 = vector.load %arg9[%c0_74, %c20] : memref<16x344xbf16, #tpu.memory_space<vmem>>, vector<16x324xbf16>
    %c128_75 = arith.constant 128 : index
    %c0_76 = arith.constant 0 : index
    %86 = vector.load %arg12[%c128_75, %c0_76] : memref<144x324xbf16, #tpu.memory_space<vmem>>, vector<16x324xbf16>
    tpu.vector_store %arg12[%c128_75, %c0_76], %85 {strides = array<i32>} : memref<144x324xbf16, #tpu.memory_space<vmem>>, vector<16x324xbf16>,
    %c0_77 = arith.constant 0 : index
    %c0_78 = arith.constant 0 : index
    %87 = vector.load %arg4[%c0_77, %c0_78] : memref<8x144xbf16, #tpu.memory_space<vmem>>, vector<8x144xbf16>
    %c0_79 = arith.constant 0 : index
    %c0_80 = arith.constant 0 : index
    %88 = vector.load %arg5[%c0_79, %c0_80] : memref<8x1xf32, #tpu.memory_space<vmem>>, vector<8x1xf32>
    %c0_81 = arith.constant 0 : index
    %c10_82 = arith.constant 10 : index
    %89 = vector.load %arg2[%c0_81, %c10_82] : memref<1x344xf32, #tpu.memory_space<vmem>>, vector<1x324xf32>
    %c0_83 = arith.constant 0 : index
    %c10_84 = arith.constant 10 : index
    %90 = vector.load %arg3[%c0_83, %c10_84] : memref<1x344xf32, #tpu.memory_space<vmem>>, vector<1x324xf32>
    %c0_85 = arith.constant 0 : index
    %c0_86 = arith.constant 0 : index
    %91 = vector.load %arg11[%c0_85, %c0_86] : memref<144x324xbf16, #tpu.memory_space<vmem>>, vector<144x324xbf16>
    %cst_87 = arith.constant dense<0.000000e+00> : vector<8x324xf32>
    %92 = tpu.matmul %87, %91, %cst_87 {dimension_numbers = #tpu.dot_dimension_numbers<[1], [0], [0], [1], [0, 0, 1, 1], [], []>} : vector<8x144xbf16>, vector<144x324xbf16>, vector<8x324xf32> -> vector<8x324xf32>
    %93 = vector.broadcast %88 : vector<8x1xf32> to vector<8x324xf32>
    %94 = arith.addf %92, %93 : vector<8x324xf32>
    %95 = vector.broadcast %89 : vector<1x324xf32> to vector<8x324xf32>
    %96 = arith.mulf %94, %95 : vector<8x324xf32>
    %c0_88 = arith.constant 0 : index
    %c0_89 = arith.constant 0 : index
    %97 = vector.load %arg12[%c0_88, %c0_89] : memref<144x324xbf16, #tpu.memory_space<vmem>>, vector<144x324xbf16>
    %cst_90 = arith.constant dense<0.000000e+00> : vector<8x324xf32>
    %98 = tpu.matmul %87, %97, %cst_90 {dimension_numbers = #tpu.dot_dimension_numbers<[1], [0], [0], [1], [0, 0, 1, 1], [], []>} : vector<8x144xbf16>, vector<144x324xbf16>, vector<8x324xf32> -> vector<8x324xf32>
    %99 = vector.broadcast %88 : vector<8x1xf32> to vector<8x324xf32>
    %100 = arith.addf %98, %99 : vector<8x324xf32>
    %101 = vector.broadcast %90 : vector<1x324xf32> to vector<8x324xf32>
    %102 = arith.mulf %100, %101 : vector<8x324xf32>
    %cst_91 = arith.constant 0.000000e+00 : bf16
    %103 = vector.broadcast %cst_91 : bf16 to vector<16x344xbf16>
    %c0_92 = arith.constant 0 : index
    %c0_93 = arith.constant 0 : index
    %104 = vector.load %arg13[%c0_92, %c0_93] : memref<16x344xbf16, #tpu.memory_space<vmem>>, vector<16x344xbf16>
    tpu.vector_store %arg13[%c0_92, %c0_93], %103 {strides = array<i32>} : memref<16x344xbf16, #tpu.memory_space<vmem>>, vector<16x344xbf16>,
    %cst_94 = arith.constant 0.000000e+00 : bf16
    %105 = vector.broadcast %cst_94 : bf16 to vector<16x344xbf16>
    %c0_95 = arith.constant 0 : index
    %c0_96 = arith.constant 0 : index
    %106 = vector.load %arg14[%c0_95, %c0_96] : memref<16x344xbf16, #tpu.memory_space<vmem>>, vector<16x344xbf16>
    tpu.vector_store %arg14[%c0_95, %c0_96], %105 {strides = array<i32>} : memref<16x344xbf16, #tpu.memory_space<vmem>>, vector<16x344xbf16>,
    %107 = arith.truncf %96 : vector<8x324xf32> to vector<8x324xbf16>
    %c0_97 = arith.constant 0 : index
    %c0_98 = arith.constant 0 : index
    %108 = vector.load %arg13[%c0_97, %c0_98] : memref<16x344xbf16, #tpu.memory_space<vmem>>, vector<8x324xbf16>
    tpu.vector_store %arg13[%c0_97, %c0_98], %107 {strides = array<i32>} : memref<16x344xbf16, #tpu.memory_space<vmem>>, vector<8x324xbf16>,
    %109 = arith.truncf %102 : vector<8x324xf32> to vector<8x324xbf16>
    %c0_99 = arith.constant 0 : index
    %c0_100 = arith.constant 0 : index
    %110 = vector.load %arg14[%c0_99, %c0_100] : memref<16x344xbf16, #tpu.memory_space<vmem>>, vector<8x324xbf16>
    tpu.vector_store %arg14[%c0_99, %c0_100], %109 {strides = array<i32>} : memref<16x344xbf16, #tpu.memory_space<vmem>>, vector<8x324xbf16>,
    %c0_101 = arith.constant 0 : index
    %c0_102 = arith.constant 0 : index
    %111 = vector.load %arg13[%c0_101, %c0_102] : memref<16x344xbf16, #tpu.memory_space<vmem>>, vector<16x324xbf16>
    %c0_103 = arith.constant 0 : index
    %c0_104 = arith.constant 0 : index
    %112 = vector.load %arg15[%c0_103, %c0_104] : memref<144x324xbf16, #tpu.memory_space<vmem>>, vector<16x324xbf16>
    tpu.vector_store %arg15[%c0_103, %c0_104], %111 {strides = array<i32>} : memref<144x324xbf16, #tpu.memory_space<vmem>>, vector<16x324xbf16>,
    %c0_105 = arith.constant 0 : index
    %c0_106 = arith.constant 0 : index
    %113 = vector.load %arg14[%c0_105, %c0_106] : memref<16x344xbf16, #tpu.memory_space<vmem>>, vector<16x324xbf16>
    %c16_107 = arith.constant 16 : index
    %c0_108 = arith.constant 0 : index
    %114 = vector.load %arg15[%c16_107, %c0_108] : memref<144x324xbf16, #tpu.memory_space<vmem>>, vector<16x324xbf16>
    tpu.vector_store %arg15[%c16_107, %c0_108], %113 {strides = array<i32>} : memref<144x324xbf16, #tpu.memory_space<vmem>>, vector<16x324xbf16>,
    %c0_109 = arith.constant 0 : index
    %c1_110 = arith.constant 1 : index
    %115 = vector.load %arg13[%c0_109, %c1_110] : memref<16x344xbf16, #tpu.memory_space<vmem>>, vector<16x324xbf16>
    %c32_111 = arith.constant 32 : index
    %c0_112 = arith.constant 0 : index
    %116 = vector.load %arg15[%c32_111, %c0_112] : memref<144x324xbf16, #tpu.memory_space<vmem>>, vector<16x324xbf16>
    tpu.vector_store %arg15[%c32_111, %c0_112], %115 {strides = array<i32>} : memref<144x324xbf16, #tpu.memory_space<vmem>>, vector<16x324xbf16>,
    %c0_113 = arith.constant 0 : index
    %c9_114 = arith.constant 9 : index
    %117 = vector.load %arg13[%c0_113, %c9_114] : memref<16x344xbf16, #tpu.memory_space<vmem>>, vector<16x324xbf16>
    %c48_115 = arith.constant 48 : index
    %c0_116 = arith.constant 0 : index
    %118 = vector.load %arg15[%c48_115, %c0_116] : memref<144x324xbf16, #tpu.memory_space<vmem>>, vector<16x324xbf16>
    tpu.vector_store %arg15[%c48_115, %c0_116], %117 {strides = array<i32>} : memref<144x324xbf16, #tpu.memory_space<vmem>>, vector<16x324xbf16>,
    %c0_117 = arith.constant 0 : index
    %c9_118 = arith.constant 9 : index
    %119 = vector.load %arg14[%c0_117, %c9_118] : memref<16x344xbf16, #tpu.memory_space<vmem>>, vector<16x324xbf16>
    %c64_119 = arith.constant 64 : index
    %c0_120 = arith.constant 0 : index
    %120 = vector.load %arg15[%c64_119, %c0_120] : memref<144x324xbf16, #tpu.memory_space<vmem>>, vector<16x324xbf16>
    tpu.vector_store %arg15[%c64_119, %c0_120], %119 {strides = array<i32>} : memref<144x324xbf16, #tpu.memory_space<vmem>>, vector<16x324xbf16>,
    %c0_121 = arith.constant 0 : index
    %c10_122 = arith.constant 10 : index
    %121 = vector.load %arg13[%c0_121, %c10_122] : memref<16x344xbf16, #tpu.memory_space<vmem>>, vector<16x324xbf16>
    %c80_123 = arith.constant 80 : index
    %c0_124 = arith.constant 0 : index
    %122 = vector.load %arg15[%c80_123, %c0_124] : memref<144x324xbf16, #tpu.memory_space<vmem>>, vector<16x324xbf16>
    tpu.vector_store %arg15[%c80_123, %c0_124], %121 {strides = array<i32>} : memref<144x324xbf16, #tpu.memory_space<vmem>>, vector<16x324xbf16>,
    %c0_125 = arith.constant 0 : index
    %c18_126 = arith.constant 18 : index
    %123 = vector.load %arg13[%c0_125, %c18_126] : memref<16x344xbf16, #tpu.memory_space<vmem>>, vector<16x324xbf16>
    %c96_127 = arith.constant 96 : index
    %c0_128 = arith.constant 0 : index
    %124 = vector.load %arg15[%c96_127, %c0_128] : memref<144x324xbf16, #tpu.memory_space<vmem>>, vector<16x324xbf16>
    tpu.vector_store %arg15[%c96_127, %c0_128], %123 {strides = array<i32>} : memref<144x324xbf16, #tpu.memory_space<vmem>>, vector<16x324xbf16>,
    %c0_129 = arith.constant 0 : index
    %c18_130 = arith.constant 18 : index
    %125 = vector.load %arg14[%c0_129, %c18_130] : memref<16x344xbf16, #tpu.memory_space<vmem>>, vector<16x324xbf16>
    %c112_131 = arith.constant 112 : index
    %c0_132 = arith.constant 0 : index
    %126 = vector.load %arg15[%c112_131, %c0_132] : memref<144x324xbf16, #tpu.memory_space<vmem>>, vector<16x324xbf16>
    tpu.vector_store %arg15[%c112_131, %c0_132], %125 {strides = array<i32>} : memref<144x324xbf16, #tpu.memory_space<vmem>>, vector<16x324xbf16>,
    %c0_133 = arith.constant 0 : index
    %c19_134 = arith.constant 19 : index
    %127 = vector.load %arg13[%c0_133, %c19_134] : memref<16x344xbf16, #tpu.memory_space<vmem>>, vector<16x324xbf16>
    %c128_135 = arith.constant 128 : index
    %c0_136 = arith.constant 0 : index
    %128 = vector.load %arg15[%c128_135, %c0_136] : memref<144x324xbf16, #tpu.memory_space<vmem>>, vector<16x324xbf16>
    tpu.vector_store %arg15[%c128_135, %c0_136], %127 {strides = array<i32>} : memref<144x324xbf16, #tpu.memory_space<vmem>>, vector<16x324xbf16>,
    %c0_137 = arith.constant 0 : index
    %c0_138 = arith.constant 0 : index
    %129 = vector.load %arg6[%c0_137, %c0_138] : memref<8x144xbf16, #tpu.memory_space<vmem>>, vector<8x144xbf16>
    %c0_139 = arith.constant 0 : index
    %c0_140 = arith.constant 0 : index
    %130 = vector.load %arg15[%c0_139, %c0_140] : memref<144x324xbf16, #tpu.memory_space<vmem>>, vector<144x324xbf16>
    %cst_141 = arith.constant dense<0.000000e+00> : vector<8x324xf32>
    %131 = tpu.matmul %129, %130, %cst_141 {dimension_numbers = #tpu.dot_dimension_numbers<[1], [0], [0], [1], [0, 0, 1, 1], [], []>} : vector<8x144xbf16>, vector<144x324xbf16>, vector<8x324xf32> -> vector<8x324xf32>
    %c0_142 = arith.constant 0 : index
    %c0_143 = arith.constant 0 : index
    %132 = vector.load %arg7[%c0_142, %c0_143] : memref<8x1xf32, #tpu.memory_space<vmem>>, vector<8x1xf32>
    %133 = vector.broadcast %132 : vector<8x1xf32> to vector<8x324xf32>
    %134 = arith.addf %131, %133 : vector<8x324xf32>
    %c0_144 = arith.constant 0 : index
    %c0_145 = arith.constant 0 : index
    %135 = vector.load %arg8[%c0_144, %c0_145] : memref<8x324xf32, #tpu.memory_space<vmem>>, vector<8x324xf32>
    tpu.vector_store %arg8[%c0_144, %c0_145], %134 {strides = array<i32>} : memref<8x324xf32, #tpu.memory_space<vmem>>, vector<8x324xf32>,
    return
  }
}

</mosaic_0001>

<llo_original>
// kernel: tpu_custom_call.1
$region0: #{tpu_custom_call.1}
  #allocation0 [shape = 'u32[]', space=smem, size = 0x4, offset = 0x4, fixed_abs, tag = 'smem constant byte address 0x4 - core index']
  #allocation1 [shape = 'u32[144,128]{1,0:T(1,128)}', space=vmem, size = 0x12000, scoped, tag = 'internal scratch']
  #allocation2 [shape = 'bf16[16,344]{1,0:T(16,128)(2,1)}', space=vmem, size = 0x3000, scoped, tag = 'scratch operand']
  #allocation3 [shape = 'bf16[16,344]{1,0:T(16,128)(2,1)}', space=vmem, size = 0x3000, scoped, tag = 'scratch operand']
  #allocation4 [shape = 'bf16[144,324]{1,0:T(16,128)(2,1)}', space=vmem, size = 0x1b000, scoped, tag = 'scratch operand']
  #allocation5 [shape = 'bf16[144,324]{1,0:T(16,128)(2,1)}', space=vmem, size = 0x1b000, scoped, tag = 'scratch operand']
  #allocation6 [shape = 'bf16[16,344]{1,0:T(16,128)(2,1)}', space=vmem, size = 0x3000, scoped, tag = 'scratch operand']
  #allocation7 [shape = 'bf16[16,344]{1,0:T(16,128)(2,1)}', space=vmem, size = 0x3000, scoped, tag = 'scratch operand']
  #allocation8 [shape = 'bf16[144,324]{1,0:T(16,128)(2,1)}', space=vmem, size = 0x1b000, scoped, tag = 'scratch operand']
  %s0 = inlined_call_operand.hbm [shape: f32[16,344], index: 0, kind: input, shape index: {}]
  %s1 = inlined_call_operand.hbm [shape: f32[16,344], index: 1, kind: input, shape index: {}]
  %s2 = inlined_call_operand.vmem [shape: f32[1,344], index: 2, kind: input, shape index: {}]
  %s3 = inlined_call_operand.vmem [shape: f32[1,344], index: 3, kind: input, shape index: {}]
  %s4 = inlined_call_operand.vmem [shape: bf16[8,144], index: 4, kind: input, shape index: {}]
  %s5 = inlined_call_operand.vmem [shape: f32[8,1], index: 5, kind: input, shape index: {}]
  %s6 = inlined_call_operand.vmem [shape: bf16[8,144], index: 6, kind: input, shape index: {}]
  %s7 = inlined_call_operand.vmem [shape: f32[8,1], index: 7, kind: input, shape index: {}]
  %s8 = inlined_call_operand.hbm [shape: f32[8,324], index: 8, kind: output, shape index: {}]
  %s9 = sld [smem:[#allocation0]]
  $region50: #{tpu_custom_call.1} parent=0
    _
  %s11 = ssub.s32 1, %s9
  %s12 = scalar_select 0, %s11, %s9
  $region1: #{tpu_custom_call.1} parent=0
    #allocation9 [shape = 'u8[24576]{0}', space=vmem, size = 0x6000, scoped, tag = 'input window, operand 0, single buffered']
    #allocation10 [shape = 's32[1]{0}', space=sflag, size = 0x4, scoped, tag = 'scoped memory for tpu_custom_call.1']
    #allocation11 [shape = 's32[1]{0}', space=sflag, size = 0x4, scoped, tag = 'scoped memory for tpu_custom_call.1']
    #allocation12 [shape = 'u8[24576]{0}', space=vmem, size = 0x6000, scoped, tag = 'input window, operand 1, single buffered']
    #allocation13 [shape = 's32[1]{0}', space=sflag, size = 0x4, scoped, tag = 'scoped memory for tpu_custom_call.1']
    #allocation14 [shape = 'u8[12288]{0}', space=vmem, size = 0x3000, scoped, tag = 'output window, operand 0, single buffered']
    %13 = vsyncpa [#allocation10], 0
    %14 = vsyncpa [#allocation13], 0
    %15 = vsyncpa [#allocation11], 0
    // Predicated region
    $region2: #{tpu_custom_call.1} parent=1 // pred_check
      _
    $region3: #{tpu_custom_call.1} parent=1 // pred_check_branch
      %17 = sbr.rel (0) target = $region5
    $region4: #{tpu_custom_call.1} parent=1 // pred_region
      %s19 = ssub.s32 768, 768
      %20 = vsyncadd [#allocation10], %s19
      %s21 = sshll.u32 [#allocation9], 4
      %s22 = int_to_ptr.vmem [resolvable:$true] %s21
      %27 = dma.hbm_to_vmem [thread:$0]  %s0, 768, %s22, [#allocation10], 384, 384, 24
    $region5: #{tpu_custom_call.1} parent=1 // pred_fallthru
      _
    // Predicated region
    $region6: #{tpu_custom_call.1} parent=1 // pred_check
      _
    $region7: #{tpu_custom_call.1} parent=1 // pred_check_branch
      %29 = sbr.rel (0) target = $region9
    $region8: #{tpu_custom_call.1} parent=1 // pred_region
      %s31 = ssub.s32 768, 768
      %32 = vsyncadd [#allocation13], %s31
      %s33 = sshll.u32 [#allocation12], 4
      %s34 = int_to_ptr.vmem [resolvable:$true] %s33
      %39 = dma.hbm_to_vmem [thread:$0]  %s1, 768, %s34, [#allocation13], 384, 384, 24
    $region9: #{tpu_custom_call.1} parent=1 // pred_fallthru
      _
    // Predicated region
    $region10: #{tpu_custom_call.1} parent=1 // pred_check
      _
    $region11: #{tpu_custom_call.1} parent=1 // pred_check_branch
      %41 = sbr.rel (0) target = $region13
    $region12: #{tpu_custom_call.1} parent=1 // pred_region
      _
    $region13: #{tpu_custom_call.1} parent=1 // pred_fallthru
      _
    // Predicated region
    $region14: #{tpu_custom_call.1} parent=1 // pred_check
      _
    $region15: #{tpu_custom_call.1} parent=1 // pred_check_branch
      %43 = sbr.rel (0) target = $region17
    $region16: #{tpu_custom_call.1} parent=1 // pred_region
      _
    $region17: #{tpu_custom_call.1} parent=1 // pred_fallthru
      _
    // Predicated region
    $region18: #{tpu_custom_call.1} parent=1 // pred_check
      _
    $region19: #{tpu_custom_call.1} parent=1 // pred_check_branch
      %45 = sbr.rel (0) target = $region21
    $region20: #{tpu_custom_call.1} parent=1 // pred_region
      _
    $region21: #{tpu_custom_call.1} parent=1 // pred_fallthru
      _
    // Predicated region
    $region22: #{tpu_custom_call.1} parent=1 // pred_check
      _
    $region23: #{tpu_custom_call.1} parent=1 // pred_check_branch
      %47 = sbr.rel (0) target = $region25
    $region24: #{tpu_custom_call.1} parent=1 // pred_region
      _
    $region25: #{tpu_custom_call.1} parent=1 // pred_fallthru
      _
    // Predicated region
    $region26: #{tpu_custom_call.1} parent=1 // pred_check
      _
    $region27: #{tpu_custom_call.1} parent=1 // pred_check_branch
      %49 = sbr.rel (0) target = $region29
    $region28: #{tpu_custom_call.1} parent=1 // pred_region
      _
    $region29: #{tpu_custom_call.1} parent=1 // pred_fallthru
      _
    // Predicated region
    $region30: #{tpu_custom_call.1} parent=1 // pred_check
      _
    $region31: #{tpu_custom_call.1} parent=1 // pred_check_branch
      %51 = sbr.rel (0) target = $region33
    $region32: #{tpu_custom_call.1} parent=1 // pred_region
      _
    $region33: #{tpu_custom_call.1} parent=1 // pred_fallthru
      _
    // Predicated region
    $region34: #{tpu_custom_call.1} parent=1 // pred_check
      _
    $region35: #{tpu_custom_call.1} parent=1 // pred_check_branch
      %53 = sbr.rel (0) target = $region37
    $region36: #{tpu_custom_call.1} parent=1 // pred_region
      %54 = dma.done [#allocation10], 768
    $region37: #{tpu_custom_call.1} parent=1 // pred_fallthru
      _
    // Predicated region
    $region38: #{tpu_custom_call.1} parent=1 // pred_check
      _
    $region39: #{tpu_custom_call.1} parent=1 // pred_check_branch
      %56 = sbr.rel (0) target = $region41
    $region40: #{tpu_custom_call.1} parent=1 // pred_region
      %57 = dma.done [#allocation13], 768
    $region41: #{tpu_custom_call.1} parent=1 // pred_fallthru
      _
    %v59 = vld [vmem:[#allocation9] sm:$0xff]
    %v60 = vld [vmem:[#allocation9 + $0x8] sm:$0xff]
    %v61 = vld [vmem:[#allocation9 + $0x10] sm:$0xff]
    %v62 = vld [vmem:[#allocation9 + $0x18] sm:$0xff]
    %v63 = vld [vmem:[#allocation9 + $0x20] sm:$0xff]
    %v64 = vld [vmem:[#allocation9 + $0x28] sm:$0xff]
    %v65 = vld [vmem:[#allocation12] sm:$0xff]
    %v66 = vld [vmem:[#allocation12 + $0x8] sm:$0xff]
    %v67 = vld [vmem:[#allocation12 + $0x10] sm:$0xff]
    %v68 = vld [vmem:[#allocation12 + $0x18] sm:$0xff]
    %v69 = vld [vmem:[#allocation12 + $0x20] sm:$0xff]
    %v70 = vld [vmem:[#allocation12 + $0x28] sm:$0xff]
    %v71 = vadd.f32 %v59, %v60
    %vm72 = vcmask 719872
    %v73 = vsel %vm72, %v61, 0.0
    %v74 = vadd.f32 %v71, %v73
    %75 = vadd.xlane.f32.xlu0 %v74
    %v76 = vpop.xlane.xlu0 %75
    %v77 = vadd.f32 %v62, %v63
    %v78 = vsel %vm72, %v64, 0.0
    %v79 = vadd.f32 %v77, %v78
    %80 = vadd.xlane.f32.xlu0 %v79
    %v81 = vpop.xlane.xlu0 %80
    %v82 = vadd.f32 %v65, %v66
    %v83 = vsel %vm72, %v67, 0.0
    %v84 = vadd.f32 %v82, %v83
    %85 = vadd.xlane.f32.xlu0 %v84
    %v86 = vpop.xlane.xlu0 %85
    %v87 = vadd.f32 %v68, %v69
    %v88 = vsel %vm72, %v70, 0.0
    %v89 = vadd.f32 %v87, %v88
    %90 = vadd.xlane.f32.xlu0 %v89
    %v91 = vpop.xlane.xlu0 %90
    %v92 = vadd.f32 %v76, %v86
    %v93 = vadd.f32 %v81, %v91
    %v94 = vmul.f32 %v92, 0.001953125
    %v95 = vmul.f32 %v93, 0.001953125
    %v96 = vmul.f32 %v59, %v59
    %v97 = vmul.f32 %v60, %v60
    %v98 = vmul.f32 %v61, %v61
    %v99 = vmul.f32 %v62, %v62
    %v100 = vmul.f32 %v63, %v63
    %v101 = vmul.f32 %v64, %v64
    %v102 = vadd.f32 %v96, %v97
    %v103 = vsel %vm72, %v98, 0.0
    %v104 = vadd.f32 %v102, %v103
    %105 = vadd.xlane.f32.xlu0 %v104
    %v106 = vpop.xlane.xlu0 %105
    %v107 = vadd.f32 %v99, %v100
    %v108 = vsel %vm72, %v101, 0.0
    %v109 = vadd.f32 %v107, %v108
    %110 = vadd.xlane.f32.xlu0 %v109
    %v111 = vpop.xlane.xlu0 %110
    %v112 = vmul.f32 %v65, %v65
    %v113 = vmul.f32 %v66, %v66
    %v114 = vmul.f32 %v67, %v67
    %v115 = vmul.f32 %v68, %v68
    %v116 = vmul.f32 %v69, %v69
    %v117 = vmul.f32 %v70, %v70
    %v118 = vadd.f32 %v112, %v113
    %v119 = vsel %vm72, %v114, 0.0
    %v120 = vadd.f32 %v118, %v119
    %121 = vadd.xlane.f32.xlu0 %v120
    %v122 = vpop.xlane.xlu0 %121
    %v123 = vadd.f32 %v115, %v116
    %v124 = vsel %vm72, %v117, 0.0
    %v125 = vadd.f32 %v123, %v124
    %126 = vadd.xlane.f32.xlu0 %v125
    %v127 = vpop.xlane.xlu0 %126
    %v128 = vadd.f32 %v106, %v122
    %v129 = vadd.f32 %v111, %v127
    %v130 = vmul.f32 %v128, 0.001953125
    %v131 = vmul.f32 %v129, 0.001953125
    %v132 = vmul.f32 %v94, %v94
    %v133 = vmul.f32 %v95, %v95
    %v134 = vsub.f32 %v130, %v132
    %v135 = vsub.f32 %v131, %v133
    %v136 = vadd.f32 %v134, 1e-05
    %v137 = vadd.f32 %v135, 1e-05
    %v138 = vrsqrt.pop %v136
    %v139 = vrsqrt.pop %v137
    %v140 = vld [vmem:[%s2] sm:$0x7]
    %v141 = vsub.f32 %v59, %v94
    %v142 = vsub.f32 %v60, %v94
    %v143 = vsub.f32 %v61, %v94
    %v144 = vsub.f32 %v62, %v95
    %v145 = vsub.f32 %v63, %v95
    %v146 = vsub.f32 %v64, %v95
    %v147 = vmul.f32 %v141, %v138
    %v148 = vmul.f32 %v142, %v138
    %v149 = vmul.f32 %v143, %v138
    %v150 = vmul.f32 %v144, %v139
    %v151 = vmul.f32 %v145, %v139
    %v152 = vmul.f32 %v146, %v139
    %vm153 = vcmp.gt.f32.partialorder %v147, 0.0
    %vm154 = vcmp.gt.f32.partialorder %v148, 0.0
    %vm155 = vcmp.gt.f32.partialorder %v149, 0.0
    %vm156 = vcmp.gt.f32.partialorder %v150, 0.0
    %vm157 = vcmp.gt.f32.partialorder %v151, 0.0
    %vm158 = vcmp.gt.f32.partialorder %v152, 0.0
    %v159 = vmul.f32 %v147, 0.1
    %v160 = vmul.f32 %v148, 0.1
    %v161 = vmul.f32 %v149, 0.1
    %v162 = vmul.f32 %v150, 0.1
    %v163 = vmul.f32 %v151, 0.1
    %v164 = vmul.f32 %v152, 0.1
    %v165 = vsel %vm153, %v147, %v159
    %v166 = vsel %vm154, %v148, %v160
    %v167 = vsel %vm155, %v149, %v161
    %v168 = vsel %vm156, %v150, %v162
    %v169 = vsel %vm157, %v151, %v163
    %v170 = vsel %vm158, %v152, %v164
    %v172 = vlaneseq
    %v173 = vshrl.u32 %v172, 7
    %v174 = vsub.s32 0, %v173
    %v175 = vrot.slane %v140, %v174
    %v176 = vlaneseq
    %v177 = vshrl.u32 %v176, 7
    %v178 = vsub.s32 1, %v177
    %v179 = vrot.slane %v140, %v178
    %v180 = vlaneseq
    %v181 = vshrl.u32 %v180, 7
    %v182 = vsub.s32 2, %v181
    %v183 = vrot.slane %v140, %v182
    %v187 = vmul.f32 %v165, %v175
    %v188 = vmul.f32 %v166, %v179
    %v189 = vmul.f32 %v167, %v183
    %v190 = vmul.f32 %v168, %v175
    %v191 = vmul.f32 %v169, %v179
    %v192 = vmul.f32 %v170, %v183
    %v193 = vpack.c.bf16 %v190, %v187
    %v194 = vpack.c.bf16 %v191, %v188
    %v195 = vpack.c.bf16 %v192, %v189
    %196 = vst [vmem:[#allocation2] sm:$0xff] %v193
    %197 = vst [vmem:[#allocation2 + $0x8] sm:$0xff] %v194
    %198 = vst.msk [vmem:[#allocation2 + $0x10] sm:$0xff] %vm72, %v195
    %v199 = vld [vmem:[%s3] sm:$0x7]
    %v200 = vsub.f32 %v65, %v94
    %v201 = vsub.f32 %v66, %v94
    %v202 = vsub.f32 %v67, %v94
    %v203 = vsub.f32 %v68, %v95
    %v204 = vsub.f32 %v69, %v95
    %v205 = vsub.f32 %v70, %v95
    %v206 = vmul.f32 %v200, %v138
    %v207 = vmul.f32 %v201, %v138
    %v208 = vmul.f32 %v202, %v138
    %v209 = vmul.f32 %v203, %v139
    %v210 = vmul.f32 %v204, %v139
    %v211 = vmul.f32 %v205, %v139
    %vm212 = vcmp.gt.f32.partialorder %v206, 0.0
    %vm213 = vcmp.gt.f32.partialorder %v207, 0.0
    %vm214 = vcmp.gt.f32.partialorder %v208, 0.0
    %vm215 = vcmp.gt.f32.partialorder %v209, 0.0
    %vm216 = vcmp.gt.f32.partialorder %v210, 0.0
    %vm217 = vcmp.gt.f32.partialorder %v211, 0.0
    %v218 = vmul.f32 %v206, 0.1
    %v219 = vmul.f32 %v207, 0.1
    %v220 = vmul.f32 %v208, 0.1
    %v221 = vmul.f32 %v209, 0.1
    %v222 = vmul.f32 %v210, 0.1
    %v223 = vmul.f32 %v211, 0.1
    %v224 = vsel %vm212, %v206, %v218
    %v225 = vsel %vm213, %v207, %v219
    %v226 = vsel %vm214, %v208, %v220
    %v227 = vsel %vm215, %v209, %v221
    %v228 = vsel %vm216, %v210, %v222
    %v229 = vsel %vm217, %v211, %v223
    %v231 = vlaneseq
    %v232 = vshrl.u32 %v231, 7
    %v233 = vsub.s32 0, %v232
    %v234 = vrot.slane %v199, %v233
    %v235 = vlaneseq
    %v236 = vshrl.u32 %v235, 7
    %v237 = vsub.s32 1, %v236
    %v238 = vrot.slane %v199, %v237
    %v239 = vlaneseq
    %v240 = vshrl.u32 %v239, 7
    %v241 = vsub.s32 2, %v240
    %v242 = vrot.slane %v199, %v241
    %v246 = vmul.f32 %v224, %v234
    %v247 = vmul.f32 %v225, %v238
    %v248 = vmul.f32 %v226, %v242
    %v249 = vmul.f32 %v227, %v234
    %v250 = vmul.f32 %v228, %v238
    %v251 = vmul.f32 %v229, %v242
    %v252 = vpack.c.bf16 %v249, %v246
    %v253 = vpack.c.bf16 %v250, %v247
    %v254 = vpack.c.bf16 %v251, %v248
    %255 = vst [vmem:[#allocation3] sm:$0xff] %v252
    %256 = vst [vmem:[#allocation3 + $0x8] sm:$0xff] %v253
    %257 = vst.msk [vmem:[#allocation3 + $0x10] sm:$0xff] %vm72, %v254
    %v258 = vld [vmem:[#allocation3] sm:$0xff]
    %v259 = vld [vmem:[#allocation3 + $0x8] sm:$0xff]
    %v260 = vld [vmem:[#allocation3 + $0x10] sm:$0xff]
    %261 = vst [vmem:[#allocation4] sm:$0xff] %v258
    %262 = vst [vmem:[#allocation4 + $0x8] sm:$0xff] %v259
    %vm263 = vcmask 556032
    %264 = vst.msk [vmem:[#allocation4 + $0x10] sm:$0xff] %vm263, %v260
    %v265 = vld [vmem:[#allocation2] sm:$0xff]
    %v266 = vld [vmem:[#allocation2 + $0x8] sm:$0xff]
    %v267 = vld [vmem:[#allocation2 + $0x10] sm:$0xff]
    %271 = vrot.lane.b32.xlu0 %v265, 127
    %v272 = vpop.permute.xlu0 %271
    %273 = vrot.lane.b32.xlu0 %v266, 127
    %v274 = vpop.permute.xlu0 %273
    %275 = vrot.lane.b32.xlu0 %v267, 127
    %v276 = vpop.permute.xlu0 %275
    %vm277 = vcmask 1039360
    %v278 = vsel %vm277, %v272, %v274
    %v279 = vsel %vm277, %v274, %v276
    %283 = vst [vmem:[#allocation5] sm:$0xff] %v278
    %284 = vst [vmem:[#allocation5 + $0x8] sm:$0xff] %v279
    %285 = vst.msk [vmem:[#allocation5 + $0x10] sm:$0xff] %vm263, %v276
    %v286 = vld [vmem:[#allocation2] sm:$0xff]
    %v287 = vld [vmem:[#allocation2 + $0x8] sm:$0xff]
    %v288 = vld [vmem:[#allocation2 + $0x10] sm:$0xff]
    %292 = vrot.lane.b32.xlu0 %v286, 127
    %v293 = vpop.permute.xlu0 %292
    %294 = vrot.lane.b32.xlu0 %v287, 127
    %v295 = vpop.permute.xlu0 %294
    %296 = vrot.lane.b32.xlu0 %v288, 127
    %v297 = vpop.permute.xlu0 %296
    %v298 = vsel %vm277, %v293, %v295
    %v299 = vsel %vm277, %v295, %v297
    %303 = vst [vmem:[#allocation4 + $0x18] sm:$0xff] %v298
    %304 = vst [vmem:[#allocation4 + $0x20] sm:$0xff] %v299
    %305 = vst.msk [vmem:[#allocation4 + $0x28] sm:$0xff] %vm263, %v297
    %v306 = vld [vmem:[#allocation3] sm:$0xff]
    %v307 = vld [vmem:[#allocation3 + $0x8] sm:$0xff]
    %v308 = vld [vmem:[#allocation3 + $0x10] sm:$0xff]
    %312 = vrot.lane.b32.xlu0 %v306, 127
    %v313 = vpop.permute.xlu0 %312
    %314 = vrot.lane.b32.xlu0 %v307, 127
    %v315 = vpop.permute.xlu0 %314
    %316 = vrot.lane.b32.xlu0 %v308, 127
    %v317 = vpop.permute.xlu0 %316
    %v318 = vsel %vm277, %v313, %v315
    %v319 = vsel %vm277, %v315, %v317
    %323 = vst [vmem:[#allocation5 + $0x18] sm:$0xff] %v318
    %324 = vst [vmem:[#allocation5 + $0x20] sm:$0xff] %v319
    %325 = vst.msk [vmem:[#allocation5 + $0x28] sm:$0xff] %vm263, %v317
    %v326 = vld [vmem:[#allocation3] sm:$0xff]
    %v327 = vld [vmem:[#allocation3 + $0x8] sm:$0xff]
    %v328 = vld [vmem:[#allocation3 + $0x10] sm:$0xff]
    %332 = vrot.lane.b32.xlu0 %v326, 127
    %v333 = vpop.permute.xlu0 %332
    %334 = vrot.lane.b32.xlu0 %v327, 127
    %v335 = vpop.permute.xlu0 %334
    %336 = vrot.lane.b32.xlu0 %v328, 127
    %v337 = vpop.permute.xlu0 %336
    %v338 = vsel %vm277, %v333, %v335
    %v339 = vsel %vm277, %v335, %v337
    %343 = vst [vmem:[#allocation4 + $0x30] sm:$0xff] %v338
    %344 = vst [vmem:[#allocation4 + $0x38] sm:$0xff] %v339
    %345 = vst.msk [vmem:[#allocation4 + $0x40] sm:$0xff] %vm263, %v337
    %v346 = vld [vmem:[#allocation2] sm:$0xff]
    %v347 = vld [vmem:[#allocation2 + $0x8] sm:$0xff]
    %v348 = vld [vmem:[#allocation2 + $0x10] sm:$0xff]
    %352 = vrot.lane.b32.xlu0 %v346, 126
    %v353 = vpop.permute.xlu0 %352
    %354 = vrot.lane.b32.xlu0 %v347, 126
    %v355 = vpop.permute.xlu0 %354
    %356 = vrot.lane.b32.xlu0 %v348, 126
    %v357 = vpop.permute.xlu0 %356
    %vm358 = vcmask 1031168
    %v359 = vsel %vm358, %v353, %v355
    %v360 = vsel %vm358, %v355, %v357
    %364 = vst [vmem:[#allocation5 + $0x30] sm:$0xff] %v359
    %365 = vst [vmem:[#allocation5 + $0x38] sm:$0xff] %v360
    %366 = vst.msk [vmem:[#allocation5 + $0x40] sm:$0xff] %vm263, %v357
    %v367 = vld [vmem:[#allocation3] sm:$0xff]
    %v368 = vld [vmem:[#allocation3 + $0x8] sm:$0xff]
    %v369 = vld [vmem:[#allocation3 + $0x10] sm:$0xff]
    %373 = vrot.lane.b32.xlu0 %v367, 119
    %v374 = vpop.permute.xlu0 %373
    %375 = vrot.lane.b32.xlu0 %v368, 119
    %v376 = vpop.permute.xlu0 %375
    %377 = vrot.lane.b32.xlu0 %v369, 119
    %v378 = vpop.permute.xlu0 %377
    %vm379 = vcmask 973824
    %v380 = vsel %vm379, %v374, %v376
    %v381 = vsel %vm379, %v376, %v378
    %385 = vst [vmem:[#allocation4 + $0x48] sm:$0xff] %v380
    %386 = vst [vmem:[#allocation4 + $0x50] sm:$0xff] %v381
    %387 = vst.msk [vmem:[#allocation4 + $0x58] sm:$0xff] %vm263, %v378
    %v388 = vld [vmem:[#allocation2] sm:$0xff]
    %v389 = vld [vmem:[#allocation2 + $0x8] sm:$0xff]
    %v390 = vld [vmem:[#allocation2 + $0x10] sm:$0xff]
    %394 = vrot.lane.b32.xlu0 %v388, 118
    %v395 = vpop.permute.xlu0 %394
    %396 = vrot.lane.b32.xlu0 %v389, 118
    %v397 = vpop.permute.xlu0 %396
    %398 = vrot.lane.b32.xlu0 %v390, 118
    %v399 = vpop.permute.xlu0 %398
    %vm400 = vcmask 965632
    %v401 = vsel %vm400, %v395, %v397
    %v402 = vsel %vm400, %v397, %v399
    %406 = vst [vmem:[#allocation5 + $0x48] sm:$0xff] %v401
    %407 = vst [vmem:[#allocation5 + $0x50] sm:$0xff] %v402
    %408 = vst.msk [vmem:[#allocation5 + $0x58] sm:$0xff] %vm263, %v399
    %v409 = vld [vmem:[#allocation2] sm:$0xff]
    %v410 = vld [vmem:[#allocation2 + $0x8] sm:$0xff]
    %v411 = vld [vmem:[#allocation2 + $0x10] sm:$0xff]
    %415 = vrot.lane.b32.xlu0 %v409, 118
    %v416 = vpop.permute.xlu0 %415
    %417 = vrot.lane.b32.xlu0 %v410, 118
    %v418 = vpop.permute.xlu0 %417
    %419 = vrot.lane.b32.xlu0 %v411, 118
    %v420 = vpop.permute.xlu0 %419
    %v421 = vsel %vm400, %v416, %v418
    %v422 = vsel %vm400, %v418, %v420
    %426 = vst [vmem:[#allocation4 + $0x60] sm:$0xff] %v421
    %427 = vst [vmem:[#allocation4 + $0x68] sm:$0xff] %v422
    %428 = vst.msk [vmem:[#allocation4 + $0x70] sm:$0xff] %vm263, %v420
    %v429 = vld [vmem:[#allocation3] sm:$0xff]
    %v430 = vld [vmem:[#allocation3 + $0x8] sm:$0xff]
    %v431 = vld [vmem:[#allocation3 + $0x10] sm:$0xff]
    %435 = vrot.lane.b32.xlu0 %v429, 118
    %v436 = vpop.permute.xlu0 %435
    %437 = vrot.lane.b32.xlu0 %v430, 118
    %v438 = vpop.permute.xlu0 %437
    %439 = vrot.lane.b32.xlu0 %v431, 118
    %v440 = vpop.permute.xlu0 %439
    %v441 = vsel %vm400, %v436, %v438
    %v442 = vsel %vm400, %v438, %v440
    %446 = vst [vmem:[#allocation5 + $0x60] sm:$0xff] %v441
    %447 = vst [vmem:[#allocation5 + $0x68] sm:$0xff] %v442
    %448 = vst.msk [vmem:[#allocation5 + $0x70] sm:$0xff] %vm263, %v440
    %v449 = vld [vmem:[#allocation3] sm:$0xff]
    %v450 = vld [vmem:[#allocation3 + $0x8] sm:$0xff]
    %v451 = vld [vmem:[#allocation3 + $0x10] sm:$0xff]
    %455 = vrot.lane.b32.xlu0 %v449, 118
    %v456 = vpop.permute.xlu0 %455
    %457 = vrot.lane.b32.xlu0 %v450, 118
    %v458 = vpop.permute.xlu0 %457
    %459 = vrot.lane.b32.xlu0 %v451, 118
    %v460 = vpop.permute.xlu0 %459
    %v461 = vsel %vm400, %v456, %v458
    %v462 = vsel %vm400, %v458, %v460
    %466 = vst [vmem:[#allocation4 + $0x78] sm:$0xff] %v461
    %467 = vst [vmem:[#allocation4 + $0x80] sm:$0xff] %v462
    %468 = vst.msk [vmem:[#allocation4 + $0x88] sm:$0xff] %vm263, %v460
    %v469 = vld [vmem:[#allocation2] sm:$0xff]
    %v470 = vld [vmem:[#allocation2 + $0x8] sm:$0xff]
    %v471 = vld [vmem:[#allocation2 + $0x10] sm:$0xff]
    %475 = vrot.lane.b32.xlu0 %v469, 117
    %v476 = vpop.permute.xlu0 %475
    %477 = vrot.lane.b32.xlu0 %v470, 117
    %v478 = vpop.permute.xlu0 %477
    %479 = vrot.lane.b32.xlu0 %v471, 117
    %v480 = vpop.permute.xlu0 %479
    %vm481 = vcmask 957440
    %v482 = vsel %vm481, %v476, %v478
    %v483 = vsel %vm481, %v478, %v480
    %487 = vst [vmem:[#allocation5 + $0x78] sm:$0xff] %v482
    %488 = vst [vmem:[#allocation5 + $0x80] sm:$0xff] %v483
    %489 = vst.msk [vmem:[#allocation5 + $0x88] sm:$0xff] %vm263, %v480
    %v490 = vld [vmem:[#allocation3] sm:$0xff]
    %v491 = vld [vmem:[#allocation3 + $0x8] sm:$0xff]
    %v492 = vld [vmem:[#allocation3 + $0x10] sm:$0xff]
    %496 = vrot.lane.b32.xlu0 %v490, 110
    %v497 = vpop.permute.xlu0 %496
    %498 = vrot.lane.b32.xlu0 %v491, 110
    %v499 = vpop.permute.xlu0 %498
    %500 = vrot.lane.b32.xlu0 %v492, 110
    %v501 = vpop.permute.xlu0 %500
    %vm502 = vcmask 900096
    %v503 = vsel %vm502, %v497, %v499
    %v504 = vsel %vm502, %v499, %v501
    %508 = vst [vmem:[#allocation4 + $0x90] sm:$0xff] %v503
    %509 = vst [vmem:[#allocation4 + $0x98] sm:$0xff] %v504
    %510 = vst.msk [vmem:[#allocation4 + $0xa0] sm:$0xff] %vm263, %v501
    %v511 = vld [vmem:[#allocation2] sm:$0xff]
    %v512 = vld [vmem:[#allocation2 + $0x8] sm:$0xff]
    %v513 = vld [vmem:[#allocation2 + $0x10] sm:$0xff]
    %517 = vrot.lane.b32.xlu0 %v511, 109
    %v518 = vpop.permute.xlu0 %517
    %519 = vrot.lane.b32.xlu0 %v512, 109
    %v520 = vpop.permute.xlu0 %519
    %521 = vrot.lane.b32.xlu0 %v513, 109
    %v522 = vpop.permute.xlu0 %521
    %vm523 = vcmask 891904
    %v524 = vsel %vm523, %v518, %v520
    %v525 = vsel %vm523, %v520, %v522
    %529 = vst [vmem:[#allocation5 + $0x90] sm:$0xff] %v524
    %530 = vst [vmem:[#allocation5 + $0x98] sm:$0xff] %v525
    %531 = vst.msk [vmem:[#allocation5 + $0xa0] sm:$0xff] %vm263, %v522
    %v532 = vld [vmem:[#allocation2] sm:$0xff]
    %v533 = vld [vmem:[#allocation2 + $0x8] sm:$0xff]
    %v534 = vld [vmem:[#allocation2 + $0x10] sm:$0xff]
    %538 = vrot.lane.b32.xlu0 %v532, 109
    %v539 = vpop.permute.xlu0 %538
    %540 = vrot.lane.b32.xlu0 %v533, 109
    %v541 = vpop.permute.xlu0 %540
    %542 = vrot.lane.b32.xlu0 %v534, 109
    %v543 = vpop.permute.xlu0 %542
    %v544 = vsel %vm523, %v539, %v541
    %v545 = vsel %vm523, %v541, %v543
    %549 = vst [vmem:[#allocation4 + $0xa8] sm:$0xff] %v544
    %550 = vst [vmem:[#allocation4 + $0xb0] sm:$0xff] %v545
    %551 = vst.msk [vmem:[#allocation4 + $0xb8] sm:$0xff] %vm263, %v543
    %v552 = vld [vmem:[#allocation3] sm:$0xff]
    %v553 = vld [vmem:[#allocation3 + $0x8] sm:$0xff]
    %v554 = vld [vmem:[#allocation3 + $0x10] sm:$0xff]
    %558 = vrot.lane.b32.xlu0 %v552, 109
    %v559 = vpop.permute.xlu0 %558
    %560 = vrot.lane.b32.xlu0 %v553, 109
    %v561 = vpop.permute.xlu0 %560
    %562 = vrot.lane.b32.xlu0 %v554, 109
    %v563 = vpop.permute.xlu0 %562
    %v564 = vsel %vm523, %v559, %v561
    %v565 = vsel %vm523, %v561, %v563
    %569 = vst [vmem:[#allocation5 + $0xa8] sm:$0xff] %v564
    %570 = vst [vmem:[#allocation5 + $0xb0] sm:$0xff] %v565
    %571 = vst.msk [vmem:[#allocation5 + $0xb8] sm:$0xff] %vm263, %v563
    %v572 = vld [vmem:[#allocation3] sm:$0xff]
    %v573 = vld [vmem:[#allocation3 + $0x8] sm:$0xff]
    %v574 = vld [vmem:[#allocation3 + $0x10] sm:$0xff]
    %578 = vrot.lane.b32.xlu0 %v572, 109
    %v579 = vpop.permute.xlu0 %578
    %580 = vrot.lane.b32.xlu0 %v573, 109
    %v581 = vpop.permute.xlu0 %580
    %582 = vrot.lane.b32.xlu0 %v574, 109
    %v583 = vpop.permute.xlu0 %582
    %v584 = vsel %vm523, %v579, %v581
    %v585 = vsel %vm523, %v581, %v583
    %589 = vst [vmem:[#allocation4 + $0xc0] sm:$0xff] %v584
    %590 = vst [vmem:[#allocation4 + $0xc8] sm:$0xff] %v585
    %591 = vst.msk [vmem:[#allocation4 + $0xd0] sm:$0xff] %vm263, %v583
    %v592 = vld [vmem:[#allocation2] sm:$0xff]
    %v593 = vld [vmem:[#allocation2 + $0x8] sm:$0xff]
    %v594 = vld [vmem:[#allocation2 + $0x10] sm:$0xff]
    %598 = vrot.lane.b32.xlu0 %v592, 108
    %v599 = vpop.permute.xlu0 %598
    %600 = vrot.lane.b32.xlu0 %v593, 108
    %v601 = vpop.permute.xlu0 %600
    %602 = vrot.lane.b32.xlu0 %v594, 108
    %v603 = vpop.permute.xlu0 %602
    %vm604 = vcmask 883712
    %v605 = vsel %vm604, %v599, %v601
    %v606 = vsel %vm604, %v601, %v603
    %610 = vst [vmem:[#allocation5 + $0xc0] sm:$0xff] %v605
    %611 = vst [vmem:[#allocation5 + $0xc8] sm:$0xff] %v606
    %612 = vst.msk [vmem:[#allocation5 + $0xd0] sm:$0xff] %vm263, %v603
    %v613 = vld [vmem:[%s4] sm:$0xff]
    %v614 = vld [vmem:[%s5] sm:$0xff]
    %v615 = vld [vmem:[%s2] sm:$0x7]
    %v616 = vld [vmem:[%s3] sm:$0x7]
    %v617 = vld [vmem:[#allocation4] sm:$0xff]
    %v618 = vld [vmem:[#allocation4 + $0x8] sm:$0xff]
    %v619 = vld [vmem:[#allocation4 + $0x10] sm:$0xff]
    %v620 = vld [vmem:[#allocation4 + $0x18] sm:$0xff]
    %v621 = vld [vmem:[#allocation4 + $0x20] sm:$0xff]
    %v622 = vld [vmem:[#allocation4 + $0x28] sm:$0xff]
    %v623 = vld [vmem:[#allocation4 + $0x30] sm:$0xff]
    %v624 = vld [vmem:[#allocation4 + $0x38] sm:$0xff]
    %v625 = vld [vmem:[#allocation4 + $0x40] sm:$0xff]
    %v626 = vld [vmem:[#allocation4 + $0x48] sm:$0xff]
    %v627 = vld [vmem:[#allocation4 + $0x50] sm:$0xff]
    %v628 = vld [vmem:[#allocation4 + $0x58] sm:$0xff]
    %v629 = vld [vmem:[#allocation4 + $0x60] sm:$0xff]
    %v630 = vld [vmem:[#allocation4 + $0x68] sm:$0xff]
    %v631 = vld [vmem:[#allocation4 + $0x70] sm:$0xff]
    %v632 = vld [vmem:[#allocation4 + $0x78] sm:$0xff]
    %v633 = vld [vmem:[#allocation4 + $0x80] sm:$0xff]
    %v634 = vld [vmem:[#allocation4 + $0x88] sm:$0xff]
    %v635 = vld [vmem:[#allocation4 + $0x90] sm:$0xff]
    %v636 = vld [vmem:[#allocation4 + $0x98] sm:$0xff]
    %v637 = vld [vmem:[#allocation4 + $0xa0] sm:$0xff]
    %v638 = vld [vmem:[#allocation4 + $0xa8] sm:$0xff]
    %v639 = vld [vmem:[#allocation4 + $0xb0] sm:$0xff]
    %v640 = vld [vmem:[#allocation4 + $0xb8] sm:$0xff]
    %v641 = vld [vmem:[#allocation4 + $0xc0] sm:$0xff]
    %v642 = vld [vmem:[#allocation4 + $0xc8] sm:$0xff]
    %v643 = vld [vmem:[#allocation4 + $0xd0] sm:$0xff]
    %645 = vset.pattern.permute.xlu0 0
    %646 = vperm.xlu0 %645, %v614
    %v647 = vpop.permute.xlu0 %646
    %v650 = vunpack.c.l.b16 %v613
    %v651 = vunpack.c.h.b16 %v613
    %v652 = vpack.c.b16 %v650, %v650
    %v653 = vpack.c.b16 %v651, %v651
    %vm655 = vcmask 130048
    %v657 = vsel %vm655, %v653, 0
    %659 = vmatprep.subr.bf16.mxu0 %v618
    %660 = vmatpush1.bf16.msra.mxu0 %v617
    %661 = vmatprep.subr.bf16.mxu0 %v621
    %662 = vmatpush1.bf16.msra.mxu0 %v620
    %663 = vmatprep.subr.bf16.mxu0 %v624
    %664 = vmatpush1.bf16.msra.mxu0 %v623
    %665 = vmatprep.subr.bf16.mxu0 %v627
    %666 = vmatpush1.bf16.msra.mxu0 %v626
    %667 = vmatprep.subr.bf16.mxu0 %v630
    %668 = vmatpush1.bf16.msra.mxu0 %v629
    %669 = vmatprep.subr.bf16.mxu0 %v633
    %670 = vmatpush1.bf16.msra.mxu0 %v632
    %671 = vmatprep.subr.bf16.mxu0 %v636
    %672 = vmatpush1.bf16.msra.mxu0 %v635
    %673 = vmatprep.subr.bf16.mxu0 %v639
    %674 = vmatpush1.bf16.msra.mxu0 %v638
    %675 = vmatprep.subr.bf16.mxu0 %v642
    %676 = vmatpush1.bf16.msra.mxu0 %v641
    %677 = vmatprep.subr.bf16.mxu0 0
    %678 = vmatpush1.bf16.msra.mxu0 0
    %679 = vmatprep.subr.bf16.mxu0 0
    %680 = vmatpush1.bf16.msra.mxu0 0
    %681 = vmatprep.subr.bf16.mxu0 0
    %682 = vmatpush1.bf16.msra.mxu0 0
    %683 = vmatprep.subr.bf16.mxu0 0
    %684 = vmatpush1.bf16.msra.mxu0 0
    %685 = vmatprep.subr.bf16.mxu0 0
    %686 = vmatpush1.bf16.msra.mxu0 0
    %687 = vmatprep.subr.bf16.mxu0 0
    %688 = vmatpush1.bf16.msra.mxu0 0
    %689 = vmatprep.subr.bf16.mxu0 0
    %690 = vmatpush1.bf16.msra.mxu0 0
    %691 = vmatprep.mubr.bf16.mxu0 %v657
    %692 = vmatmul.mubr.bf16.gmra.mrb[0].mxu0 %v652
    %v693 = vpop.f32.mrb[0].mxu0
    %v694 = vadd.f32 %v647, %v693
    %v695 = vpop.f32.mrb[0].mxu0
    %v696 = vadd.f32 %v647, %v695
    %v697 = vpop.f32.mrb[0].mxu0
    %v698 = vpop.f32.mrb[0].mxu0
    %699 = vdwg.mxu0
    %700 = vmatprep.subr.bf16.mxu0 0
    %701 = vmatpush1.bf16.msra.mxu0 %v619
    %702 = vmatprep.subr.bf16.mxu0 0
    %703 = vmatpush1.bf16.msra.mxu0 %v622
    %704 = vmatprep.subr.bf16.mxu0 0
    %705 = vmatpush1.bf16.msra.mxu0 %v625
    %706 = vmatprep.subr.bf16.mxu0 0
    %707 = vmatpush1.bf16.msra.mxu0 %v628
    %708 = vmatprep.subr.bf16.mxu0 0
    %709 = vmatpush1.bf16.msra.mxu0 %v631
    %710 = vmatprep.subr.bf16.mxu0 0
    %711 = vmatpush1.bf16.msra.mxu0 %v634
    %712 = vmatprep.subr.bf16.mxu0 0
    %713 = vmatpush1.bf16.msra.mxu0 %v637
    %714 = vmatprep.subr.bf16.mxu0 0
    %715 = vmatpush1.bf16.msra.mxu0 %v640
    %716 = vmatprep.subr.bf16.mxu0 0
    %717 = vmatpush1.bf16.msra.mxu0 %v643
    %718 = vmatprep.subr.bf16.mxu0 0
    %719 = vmatpush1.bf16.msra.mxu0 0
    %720 = vmatprep.subr.bf16.mxu0 0
    %721 = vmatpush1.bf16.msra.mxu0 0
    %722 = vmatprep.subr.bf16.mxu0 0
    %723 = vmatpush1.bf16.msra.mxu0 0
    %724 = vmatprep.subr.bf16.mxu0 0
    %725 = vmatpush1.bf16.msra.mxu0 0
    %726 = vmatprep.subr.bf16.mxu0 0
    %727 = vmatpush1.bf16.msra.mxu0 0
    %728 = vmatprep.subr.bf16.mxu0 0
    %729 = vmatpush1.bf16.msra.mxu0 0
    %730 = vmatprep.subr.bf16.mxu0 0
    %731 = vmatpush1.bf16.msra.mxu0 0
    %732 = vmatprep.mubr.bf16.mxu0 %v657
    %733 = vmatmul.mubr.bf16.gmra.mrb[0].mxu0 %v652
    %v734 = vpop.f32.mrb[0].mxu0
    %v735 = vadd.f32 %v647, %v734
    %v736 = vpop.f32.mrb[0].mxu0
    %v737 = vpop.f32.mrb[0].mxu0
    %v738 = vpop.f32.mrb[0].mxu0
    %739 = vdwg.mxu0
    %v741 = vlaneseq
    %v742 = vshrl.u32 %v741, 7
    %v743 = vsub.s32 0, %v742
    %v744 = vrot.slane %v615, %v743
    %v745 = vlaneseq
    %v746 = vshrl.u32 %v745, 7
    %v747 = vsub.s32 1, %v746
    %v748 = vrot.slane %v615, %v747
    %v749 = vlaneseq
    %v750 = vshrl.u32 %v749, 7
    %v751 = vsub.s32 2, %v750
    %v752 = vrot.slane %v615, %v751
    %753 = vrot.lane.b32.xlu0 %v744, 118
    %v754 = vpop.permute.xlu0 %753
    %755 = vrot.lane.b32.xlu0 %v748, 118
    %v756 = vpop.permute.xlu0 %755
    %757 = vrot.lane.b32.xlu0 %v752, 118
    %v758 = vpop.permute.xlu0 %757
    %vm759 = vcmask 965632
    %v760 = vsel %vm759, %v754, %v756
    %v761 = vsel %vm759, %v756, %v758
    %v765 = vmul.f32 %v694, %v760
    %v766 = vmul.f32 %v696, %v761
    %v767 = vmul.f32 %v735, %v758
    %v768 = vld [vmem:[#allocation5] sm:$0xff]
    %v769 = vld [vmem:[#allocation5 + $0x8] sm:$0xff]
    %v770 = vld [vmem:[#allocation5 + $0x10] sm:$0xff]
    %v771 = vld [vmem:[#allocation5 + $0x18] sm:$0xff]
    %v772 = vld [vmem:[#allocation5 + $0x20] sm:$0xff]
    %v773 = vld [vmem:[#allocation5 + $0x28] sm:$0xff]
    %v774 = vld [vmem:[#allocation5 + $0x30] sm:$0xff]
    %v775 = vld [vmem:[#allocation5 + $0x38] sm:$0xff]
    %v776 = vld [vmem:[#allocation5 + $0x40] sm:$0xff]
    %v777 = vld [vmem:[#allocation5 + $0x48] sm:$0xff]
    %v778 = vld [vmem:[#allocation5 + $0x50] sm:$0xff]
    %v779 = vld [vmem:[#allocation5 + $0x58] sm:$0xff]
    %v780 = vld [vmem:[#allocation5 + $0x60] sm:$0xff]
    %v781 = vld [vmem:[#allocation5 + $0x68] sm:$0xff]
    %v782 = vld [vmem:[#allocation5 + $0x70] sm:$0xff]
    %v783 = vld [vmem:[#allocation5 + $0x78] sm:$0xff]
    %v784 = vld [vmem:[#allocation5 + $0x80] sm:$0xff]
    %v785 = vld [vmem:[#allocation5 + $0x88] sm:$0xff]
    %v786 = vld [vmem:[#allocation5 + $0x90] sm:$0xff]
    %v787 = vld [vmem:[#allocation5 + $0x98] sm:$0xff]
    %v788 = vld [vmem:[#allocation5 + $0xa0] sm:$0xff]
    %v789 = vld [vmem:[#allocation5 + $0xa8] sm:$0xff]
    %v790 = vld [vmem:[#allocation5 + $0xb0] sm:$0xff]
    %v791 = vld [vmem:[#allocation5 + $0xb8] sm:$0xff]
    %v792 = vld [vmem:[#allocation5 + $0xc0] sm:$0xff]
    %v793 = vld [vmem:[#allocation5 + $0xc8] sm:$0xff]
    %v794 = vld [vmem:[#allocation5 + $0xd0] sm:$0xff]
    %795 = vmatprep.subr.bf16.mxu0 %v769
    %796 = vmatpush1.bf16.msra.mxu0 %v768
    %797 = vmatprep.subr.bf16.mxu0 %v772
    %798 = vmatpush1.bf16.msra.mxu0 %v771
    %799 = vmatprep.subr.bf16.mxu0 %v775
    %800 = vmatpush1.bf16.msra.mxu0 %v774
    %801 = vmatprep.subr.bf16.mxu0 %v778
    %802 = vmatpush1.bf16.msra.mxu0 %v777
    %803 = vmatprep.subr.bf16.mxu0 %v781
    %804 = vmatpush1.bf16.msra.mxu0 %v780
    %805 = vmatprep.subr.bf16.mxu0 %v784
    %806 = vmatpush1.bf16.msra.mxu0 %v783
    %807 = vmatprep.subr.bf16.mxu0 %v787
    %808 = vmatpush1.bf16.msra.mxu0 %v786
    %809 = vmatprep.subr.bf16.mxu0 %v790
    %810 = vmatpush1.bf16.msra.mxu0 %v789
    %811 = vmatprep.subr.bf16.mxu0 %v793
    %812 = vmatpush1.bf16.msra.mxu0 %v792
    %813 = vmatprep.subr.bf16.mxu0 0
    %814 = vmatpush1.bf16.msra.mxu0 0
    %815 = vmatprep.subr.bf16.mxu0 0
    %816 = vmatpush1.bf16.msra.mxu0 0
    %817 = vmatprep.subr.bf16.mxu0 0
    %818 = vmatpush1.bf16.msra.mxu0 0
    %819 = vmatprep.subr.bf16.mxu0 0
    %820 = vmatpush1.bf16.msra.mxu0 0
    %821 = vmatprep.subr.bf16.mxu0 0
    %822 = vmatpush1.bf16.msra.mxu0 0
    %823 = vmatprep.subr.bf16.mxu0 0
    %824 = vmatpush1.bf16.msra.mxu0 0
    %825 = vmatprep.subr.bf16.mxu0 0
    %826 = vmatpush1.bf16.msra.mxu0 0
    %827 = vmatprep.mubr.bf16.mxu0 %v657
    %828 = vmatmul.mubr.bf16.gmra.mrb[0].mxu0 %v652
    %v829 = vpop.f32.mrb[0].mxu0
    %v830 = vadd.f32 %v647, %v829
    %v831 = vpop.f32.mrb[0].mxu0
    %v832 = vadd.f32 %v647, %v831
    %v833 = vpop.f32.mrb[0].mxu0
    %v834 = vpop.f32.mrb[0].mxu0
    %835 = vdwg.mxu0
    %836 = vmatprep.subr.bf16.mxu0 0
    %837 = vmatpush1.bf16.msra.mxu0 %v770
    %838 = vmatprep.subr.bf16.mxu0 0
    %839 = vmatpush1.bf16.msra.mxu0 %v773
    %840 = vmatprep.subr.bf16.mxu0 0
    %841 = vmatpush1.bf16.msra.mxu0 %v776
    %842 = vmatprep.subr.bf16.mxu0 0
    %843 = vmatpush1.bf16.msra.mxu0 %v779
    %844 = vmatprep.subr.bf16.mxu0 0
    %845 = vmatpush1.bf16.msra.mxu0 %v782
    %846 = vmatprep.subr.bf16.mxu0 0
    %847 = vmatpush1.bf16.msra.mxu0 %v785
    %848 = vmatprep.subr.bf16.mxu0 0
    %849 = vmatpush1.bf16.msra.mxu0 %v788
    %850 = vmatprep.subr.bf16.mxu0 0
    %851 = vmatpush1.bf16.msra.mxu0 %v791
    %852 = vmatprep.subr.bf16.mxu0 0
    %853 = vmatpush1.bf16.msra.mxu0 %v794
    %854 = vmatprep.subr.bf16.mxu0 0
    %855 = vmatpush1.bf16.msra.mxu0 0
    %856 = vmatprep.subr.bf16.mxu0 0
    %857 = vmatpush1.bf16.msra.mxu0 0
    %858 = vmatprep.subr.bf16.mxu0 0
    %859 = vmatpush1.bf16.msra.mxu0 0
    %860 = vmatprep.subr.bf16.mxu0 0
    %861 = vmatpush1.bf16.msra.mxu0 0
    %862 = vmatprep.subr.bf16.mxu0 0
    %863 = vmatpush1.bf16.msra.mxu0 0
    %864 = vmatprep.subr.bf16.mxu0 0
    %865 = vmatpush1.bf16.msra.mxu0 0
    %866 = vmatprep.subr.bf16.mxu0 0
    %867 = vmatpush1.bf16.msra.mxu0 0
    %868 = vmatprep.mubr.bf16.mxu0 %v657
    %869 = vmatmul.mubr.bf16.gmra.mrb[0].mxu0 %v652
    %v870 = vpop.f32.mrb[0].mxu0
    %v871 = vadd.f32 %v647, %v870
    %v872 = vpop.f32.mrb[0].mxu0
    %v873 = vpop.f32.mrb[0].mxu0
    %v874 = vpop.f32.mrb[0].mxu0
    %875 = vdwg.mxu0
    %v877 = vlaneseq
    %v878 = vshrl.u32 %v877, 7
    %v879 = vsub.s32 0, %v878
    %v880 = vrot.slane %v616, %v879
    %v881 = vlaneseq
    %v882 = vshrl.u32 %v881, 7
    %v883 = vsub.s32 1, %v882
    %v884 = vrot.slane %v616, %v883
    %v885 = vlaneseq
    %v886 = vshrl.u32 %v885, 7
    %v887 = vsub.s32 2, %v886
    %v888 = vrot.slane %v616, %v887
    %889 = vrot.lane.b32.xlu0 %v880, 118
    %v890 = vpop.permute.xlu0 %889
    %891 = vrot.lane.b32.xlu0 %v884, 118
    %v892 = vpop.permute.xlu0 %891
    %893 = vrot.lane.b32.xlu0 %v888, 118
    %v894 = vpop.permute.xlu0 %893
    %v895 = vsel %vm759, %v890, %v892
    %v896 = vsel %vm759, %v892, %v894
    %v900 = vmul.f32 %v830, %v895
    %v901 = vmul.f32 %v832, %v896
    %v902 = vmul.f32 %v871, %v894
    %903 = vst [vmem:[#allocation6] sm:$0xff] 0
    %904 = vst [vmem:[#allocation6 + $0x8] sm:$0xff] 0
    %905 = vst.msk [vmem:[#allocation6 + $0x10] sm:$0xff] %vm72, 0
    %906 = vst [vmem:[#allocation7] sm:$0xff] 0
    %907 = vst [vmem:[#allocation7 + $0x8] sm:$0xff] 0
    %908 = vst.msk [vmem:[#allocation7 + $0x10] sm:$0xff] %vm72, 0
    %v909 = vpack.c.bf16 %v765, %v765
    %v910 = vpack.c.bf16 %v766, %v766
    %v911 = vpack.c.bf16 %v767, %v767
    %912 = vst [vmem:[#allocation6] sm:$0xf] %v909
    %913 = vst [vmem:[#allocation6 + $0x8] sm:$0xf] %v910
    %vm914 = vcmask 551936
    %915 = vst.msk [vmem:[#allocation6 + $0x10] sm:$0xf] %vm914, %v911
    %v916 = vpack.c.bf16 %v900, %v900
    %v917 = vpack.c.bf16 %v901, %v901
    %v918 = vpack.c.bf16 %v902, %v902
    %919 = vst [vmem:[#allocation7] sm:$0xf] %v916
    %920 = vst [vmem:[#allocation7 + $0x8] sm:$0xf] %v917
    %921 = vst.msk [vmem:[#allocation7 + $0x10] sm:$0xf] %vm914, %v918
    %v922 = vld [vmem:[#allocation6] sm:$0xff]
    %v923 = vld [vmem:[#allocation6 + $0x8] sm:$0xff]
    %v924 = vld [vmem:[#allocation6 + $0x10] sm:$0xff]
    %925 = vst [vmem:[#allocation8] sm:$0xff] %v922
    %926 = vst [vmem:[#allocation8 + $0x8] sm:$0xff] %v923
    %927 = vst.msk [vmem:[#allocation8 + $0x10] sm:$0xff] %vm263, %v924
    %v928 = vld [vmem:[#allocation7] sm:$0xff]
    %v929 = vld [vmem:[#allocation7 + $0x8] sm:$0xff]
    %v930 = vld [vmem:[#allocation7 + $0x10] sm:$0xff]
    %931 = vst [vmem:[#allocation8 + $0x18] sm:$0xff] %v928
    %932 = vst [vmem:[#allocation8 + $0x20] sm:$0xff] %v929
    %933 = vst.msk [vmem:[#allocation8 + $0x28] sm:$0xff] %vm263, %v930
    %v934 = vld [vmem:[#allocation6] sm:$0xff]
    %v935 = vld [vmem:[#allocation6 + $0x8] sm:$0xff]
    %v936 = vld [vmem:[#allocation6 + $0x10] sm:$0xff]
    %940 = vrot.lane.b32.xlu0 %v934, 127
    %v941 = vpop.permute.xlu0 %940
    %942 = vrot.lane.b32.xlu0 %v935, 127
    %v943 = vpop.permute.xlu0 %942
    %944 = vrot.lane.b32.xlu0 %v936, 127
    %v945 = vpop.permute.xlu0 %944
    %v946 = vsel %vm277, %v941, %v943
    %v947 = vsel %vm277, %v943, %v945
    %951 = vst [vmem:[#allocation8 + $0x30] sm:$0xff] %v946
    %952 = vst [vmem:[#allocation8 + $0x38] sm:$0xff] %v947
    %953 = vst.msk [vmem:[#allocation8 + $0x40] sm:$0xff] %vm263, %v945
    %v954 = vld [vmem:[#allocation6] sm:$0xff]
    %v955 = vld [vmem:[#allocation6 + $0x8] sm:$0xff]
    %v956 = vld [vmem:[#allocation6 + $0x10] sm:$0xff]
    %960 = vrot.lane.b32.xlu0 %v954, 119
    %v961 = vpop.permute.xlu0 %960
    %962 = vrot.lane.b32.xlu0 %v955, 119
    %v963 = vpop.permute.xlu0 %962
    %964 = vrot.lane.b32.xlu0 %v956, 119
    %v965 = vpop.permute.xlu0 %964
    %v966 = vsel %vm379, %v961, %v963
    %v967 = vsel %vm379, %v963, %v965
    %971 = vst [vmem:[#allocation8 + $0x48] sm:$0xff] %v966
    %972 = vst [vmem:[#allocation8 + $0x50] sm:$0xff] %v967
    %973 = vst.msk [vmem:[#allocation8 + $0x58] sm:$0xff] %vm263, %v965
    %v974 = vld [vmem:[#allocation7] sm:$0xff]
    %v975 = vld [vmem:[#allocation7 + $0x8] sm:$0xff]
    %v976 = vld [vmem:[#allocation7 + $0x10] sm:$0xff]
    %980 = vrot.lane.b32.xlu0 %v974, 119
    %v981 = vpop.permute.xlu0 %980
    %982 = vrot.lane.b32.xlu0 %v975, 119
    %v983 = vpop.permute.xlu0 %982
    %984 = vrot.lane.b32.xlu0 %v976, 119
    %v985 = vpop.permute.xlu0 %984
    %v986 = vsel %vm379, %v981, %v983
    %v987 = vsel %vm379, %v983, %v985
    %991 = vst [vmem:[#allocation8 + $0x60] sm:$0xff] %v986
    %992 = vst [vmem:[#allocation8 + $0x68] sm:$0xff] %v987
    %993 = vst.msk [vmem:[#allocation8 + $0x70] sm:$0xff] %vm263, %v985
    %v994 = vld [vmem:[#allocation6] sm:$0xff]
    %v995 = vld [vmem:[#allocation6 + $0x8] sm:$0xff]
    %v996 = vld [vmem:[#allocation6 + $0x10] sm:$0xff]
    %1000 = vrot.lane.b32.xlu0 %v994, 118
    %v1001 = vpop.permute.xlu0 %1000
    %1002 = vrot.lane.b32.xlu0 %v995, 118
    %v1003 = vpop.permute.xlu0 %1002
    %1004 = vrot.lane.b32.xlu0 %v996, 118
    %v1005 = vpop.permute.xlu0 %1004
    %v1006 = vsel %vm400, %v1001, %v1003
    %v1007 = vsel %vm400, %v1003, %v1005
    %1011 = vst [vmem:[#allocation8 + $0x78] sm:$0xff] %v1006
    %1012 = vst [vmem:[#allocation8 + $0x80] sm:$0xff] %v1007
    %1013 = vst.msk [vmem:[#allocation8 + $0x88] sm:$0xff] %vm263, %v1005
    %v1014 = vld [vmem:[#allocation6] sm:$0xff]
    %v1015 = vld [vmem:[#allocation6 + $0x8] sm:$0xff]
    %v1016 = vld [vmem:[#allocation6 + $0x10] sm:$0xff]
    %1020 = vrot.lane.b32.xlu0 %v1014, 110
    %v1021 = vpop.permute.xlu0 %1020
    %1022 = vrot.lane.b32.xlu0 %v1015, 110
    %v1023 = vpop.permute.xlu0 %1022
    %1024 = vrot.lane.b32.xlu0 %v1016, 110
    %v1025 = vpop.permute.xlu0 %1024
    %v1026 = vsel %vm502, %v1021, %v1023
    %v1027 = vsel %vm502, %v1023, %v1025
    %1031 = vst [vmem:[#allocation8 + $0x90] sm:$0xff] %v1026
    %1032 = vst [vmem:[#allocation8 + $0x98] sm:$0xff] %v1027
    %1033 = vst.msk [vmem:[#allocation8 + $0xa0] sm:$0xff] %vm263, %v1025
    %v1034 = vld [vmem:[#allocation7] sm:$0xff]
    %v1035 = vld [vmem:[#allocation7 + $0x8] sm:$0xff]
    %v1036 = vld [vmem:[#allocation7 + $0x10] sm:$0xff]
    %1040 = vrot.lane.b32.xlu0 %v1034, 110
    %v1041 = vpop.permute.xlu0 %1040
    %1042 = vrot.lane.b32.xlu0 %v1035, 110
    %v1043 = vpop.permute.xlu0 %1042
    %1044 = vrot.lane.b32.xlu0 %v1036, 110
    %v1045 = vpop.permute.xlu0 %1044
    %v1046 = vsel %vm502, %v1041, %v1043
    %v1047 = vsel %vm502, %v1043, %v1045
    %1051 = vst [vmem:[#allocation8 + $0xa8] sm:$0xff] %v1046
    %1052 = vst [vmem:[#allocation8 + $0xb0] sm:$0xff] %v1047
    %1053 = vst.msk [vmem:[#allocation8 + $0xb8] sm:$0xff] %vm263, %v1045
    %v1054 = vld [vmem:[#allocation6] sm:$0xff]
    %v1055 = vld [vmem:[#allocation6 + $0x8] sm:$0xff]
    %v1056 = vld [vmem:[#allocation6 + $0x10] sm:$0xff]
    %1060 = vrot.lane.b32.xlu0 %v1054, 109
    %v1061 = vpop.permute.xlu0 %1060
    %1062 = vrot.lane.b32.xlu0 %v1055, 109
    %v1063 = vpop.permute.xlu0 %1062
    %1064 = vrot.lane.b32.xlu0 %v1056, 109
    %v1065 = vpop.permute.xlu0 %1064
    %v1066 = vsel %vm523, %v1061, %v1063
    %v1067 = vsel %vm523, %v1063, %v1065
    %1071 = vst [vmem:[#allocation8 + $0xc0] sm:$0xff] %v1066
    %1072 = vst [vmem:[#allocation8 + $0xc8] sm:$0xff] %v1067
    %1073 = vst.msk [vmem:[#allocation8 + $0xd0] sm:$0xff] %vm263, %v1065
    %v1074 = vld [vmem:[%s6] sm:$0xff]
    %v1075 = vld [vmem:[#allocation8] sm:$0xff]
    %v1076 = vld [vmem:[#allocation8 + $0x8] sm:$0xff]
    %v1077 = vld [vmem:[#allocation8 + $0x10] sm:$0xff]
    %v1078 = vld [vmem:[#allocation8 + $0x18] sm:$0xff]
    %v1079 = vld [vmem:[#allocation8 + $0x20] sm:$0xff]
    %v1080 = vld [vmem:[#allocation8 + $0x28] sm:$0xff]
    %v1081 = vld [vmem:[#allocation8 + $0x30] sm:$0xff]
    %v1082 = vld [vmem:[#allocation8 + $0x38] sm:$0xff]
    %v1083 = vld [vmem:[#allocation8 + $0x40] sm:$0xff]
    %v1084 = vld [vmem:[#allocation8 + $0x48] sm:$0xff]
    %v1085 = vld [vmem:[#allocation8 + $0x50] sm:$0xff]
    %v1086 = vld [vmem:[#allocation8 + $0x58] sm:$0xff]
    %v1087 = vld [vmem:[#allocation8 + $0x60] sm:$0xff]
    %v1088 = vld [vmem:[#allocation8 + $0x68] sm:$0xff]
    %v1089 = vld [vmem:[#allocation8 + $0x70] sm:$0xff]
    %v1090 = vld [vmem:[#allocation8 + $0x78] sm:$0xff]
    %v1091 = vld [vmem:[#allocation8 + $0x80] sm:$0xff]
    %v1092 = vld [vmem:[#allocation8 + $0x88] sm:$0xff]
    %v1093 = vld [vmem:[#allocation8 + $0x90] sm:$0xff]
    %v1094 = vld [vmem:[#allocation8 + $0x98] sm:$0xff]
    %v1095 = vld [vmem:[#allocation8 + $0xa0] sm:$0xff]
    %v1096 = vld [vmem:[#allocation8 + $0xa8] sm:$0xff]
    %v1097 = vld [vmem:[#allocation8 + $0xb0] sm:$0xff]
    %v1098 = vld [vmem:[#allocation8 + $0xb8] sm:$0xff]
    %v1099 = vld [vmem:[#allocation8 + $0xc0] sm:$0xff]
    %v1100 = vld [vmem:[#allocation8 + $0xc8] sm:$0xff]
    %v1101 = vld [vmem:[#allocation8 + $0xd0] sm:$0xff]
    %v1102 = vld [vmem:[%s7] sm:$0xff]
    %1104 = vset.pattern.permute.xlu0 0
    %1105 = vperm.xlu0 %1104, %v1102
    %v1106 = vpop.permute.xlu0 %1105
    %v1109 = vunpack.c.l.b16 %v1074
    %v1110 = vunpack.c.h.b16 %v1074
    %v1111 = vpack.c.b16 %v1109, %v1109
    %v1112 = vpack.c.b16 %v1110, %v1110
    %v1115 = vsel %vm655, %v1112, 0
    %1117 = vmatprep.subr.bf16.mxu0 %v1076
    %1118 = vmatpush1.bf16.msra.mxu0 %v1075
    %1119 = vmatprep.subr.bf16.mxu0 %v1079
    %1120 = vmatpush1.bf16.msra.mxu0 %v1078
    %1121 = vmatprep.subr.bf16.mxu0 %v1082
    %1122 = vmatpush1.bf16.msra.mxu0 %v1081
    %1123 = vmatprep.subr.bf16.mxu0 %v1085
    %1124 = vmatpush1.bf16.msra.mxu0 %v1084
    %1125 = vmatprep.subr.bf16.mxu0 %v1088
    %1126 = vmatpush1.bf16.msra.mxu0 %v1087
    %1127 = vmatprep.subr.bf16.mxu0 %v1091
    %1128 = vmatpush1.bf16.msra.mxu0 %v1090
    %1129 = vmatprep.subr.bf16.mxu0 %v1094
    %1130 = vmatpush1.bf16.msra.mxu0 %v1093
    %1131 = vmatprep.subr.bf16.mxu0 %v1097
    %1132 = vmatpush1.bf16.msra.mxu0 %v1096
    %1133 = vmatprep.subr.bf16.mxu0 %v1100
    %1134 = vmatpush1.bf16.msra.mxu0 %v1099
    %1135 = vmatprep.subr.bf16.mxu0 0
    %1136 = vmatpush1.bf16.msra.mxu0 0
    %1137 = vmatprep.subr.bf16.mxu0 0
    %1138 = vmatpush1.bf16.msra.mxu0 0
    %1139 = vmatprep.subr.bf16.mxu0 0
    %1140 = vmatpush1.bf16.msra.mxu0 0
    %1141 = vmatprep.subr.bf16.mxu0 0
    %1142 = vmatpush1.bf16.msra.mxu0 0
    %1143 = vmatprep.subr.bf16.mxu0 0
    %1144 = vmatpush1.bf16.msra.mxu0 0
    %1145 = vmatprep.subr.bf16.mxu0 0
    %1146 = vmatpush1.bf16.msra.mxu0 0
    %1147 = vmatprep.subr.bf16.mxu0 0
    %1148 = vmatpush1.bf16.msra.mxu0 0
    %1149 = vmatprep.mubr.bf16.mxu0 %v1115
    %1150 = vmatmul.mubr.bf16.gmra.mrb[0].mxu0 %v1111
    %v1151 = vpop.f32.mrb[0].mxu0
    %v1152 = vadd.f32 %v1106, %v1151
    %v1153 = vpop.f32.mrb[0].mxu0
    %v1154 = vadd.f32 %v1106, %v1153
    %v1155 = vpop.f32.mrb[0].mxu0
    %v1156 = vpop.f32.mrb[0].mxu0
    %1157 = vdwg.mxu0
    %1158 = vmatprep.subr.bf16.mxu0 0
    %1159 = vmatpush1.bf16.msra.mxu0 %v1077
    %1160 = vmatprep.subr.bf16.mxu0 0
    %1161 = vmatpush1.bf16.msra.mxu0 %v1080
    %1162 = vmatprep.subr.bf16.mxu0 0
    %1163 = vmatpush1.bf16.msra.mxu0 %v1083
    %1164 = vmatprep.subr.bf16.mxu0 0
    %1165 = vmatpush1.bf16.msra.mxu0 %v1086
    %1166 = vmatprep.subr.bf16.mxu0 0
    %1167 = vmatpush1.bf16.msra.mxu0 %v1089
    %1168 = vmatprep.subr.bf16.mxu0 0
    %1169 = vmatpush1.bf16.msra.mxu0 %v1092
    %1170 = vmatprep.subr.bf16.mxu0 0
    %1171 = vmatpush1.bf16.msra.mxu0 %v1095
    %1172 = vmatprep.subr.bf16.mxu0 0
    %1173 = vmatpush1.bf16.msra.mxu0 %v1098
    %1174 = vmatprep.subr.bf16.mxu0 0
    %1175 = vmatpush1.bf16.msra.mxu0 %v1101
    %1176 = vmatprep.subr.bf16.mxu0 0
    %1177 = vmatpush1.bf16.msra.mxu0 0
    %1178 = vmatprep.subr.bf16.mxu0 0
    %1179 = vmatpush1.bf16.msra.mxu0 0
    %1180 = vmatprep.subr.bf16.mxu0 0
    %1181 = vmatpush1.bf16.msra.mxu0 0
    %1182 = vmatprep.subr.bf16.mxu0 0
    %1183 = vmatpush1.bf16.msra.mxu0 0
    %1184 = vmatprep.subr.bf16.mxu0 0
    %1185 = vmatpush1.bf16.msra.mxu0 0
    %1186 = vmatprep.subr.bf16.mxu0 0
    %1187 = vmatpush1.bf16.msra.mxu0 0
    %1188 = vmatprep.subr.bf16.mxu0 0
    %1189 = vmatpush1.bf16.msra.mxu0 0
    %1190 = vmatprep.mubr.bf16.mxu0 %v1115
    %1191 = vmatmul.mubr.bf16.gmra.mrb[0].mxu0 %v1111
    %v1192 = vpop.f32.mrb[0].mxu0
    %v1193 = vadd.f32 %v1106, %v1192
    %v1194 = vpop.f32.mrb[0].mxu0
    %v1195 = vpop.f32.mrb[0].mxu0
    %v1196 = vpop.f32.mrb[0].mxu0
    %1197 = vdwg.mxu0
    %1198 = vst [vmem:[#allocation14] sm:$0xff] %v1152
    %1199 = vst [vmem:[#allocation14 + $0x8] sm:$0xff] %v1154
    %1200 = vst.msk [vmem:[#allocation14 + $0x10] sm:$0xff] %vm263, %v1193
    // Predicated region
    $region42: #{tpu_custom_call.1} parent=1 // pred_check
      _
    $region43: #{tpu_custom_call.1} parent=1 // pred_check_branch
      %1202 = sbr.rel (0) target = $region45
    $region44: #{tpu_custom_call.1} parent=1 // pred_region
      %s1204 = ssub.s32 384, 384
      %1205 = vsyncadd [#allocation11], %s1204
      %s1207 = sshll.u32 [#allocation14], 4
      %s1208 = int_to_ptr.vmem [resolvable:$true] %s1207
      %1210 = dma.vmem_to_hbm [thread:$0]  %s1208, 384, %s8, [#allocation11]
    $region45: #{tpu_custom_call.1} parent=1 // pred_fallthru
      _
    // Predicated region
    $region46: #{tpu_custom_call.1} parent=1 // pred_check
      _
    $region47: #{tpu_custom_call.1} parent=1 // pred_check_branch
      %1212 = sbr.rel (0) target = $region49
    $region48: #{tpu_custom_call.1} parent=1 // pred_region
      %1213 = dma.done [#allocation11], 384
    $region49: #{tpu_custom_call.1} parent=1 // pred_fallthru
      _
    %1214 = vsyncpa [#allocation10], 1
    %1215 = vsyncpa [#allocation13], 1
    %1216 = vsyncpa [#allocation11], 1

</llo_original>
